<compile_context>
chip_gen: v7x
topology: tpu7x:2x2x1
jax: 0.10.0
libtpu: 0.0.40
codegen_flags: <defaults>
</compile_context>

<pallas_src>
import functools

import jax
import jax.numpy as jnp
from jax import lax
from jax.experimental import pallas as pl
from jax.experimental.pallas import tpu as pltpu


def _round_up(x, m):
    return (x + m - 1) // m * m


def _vmem_limit_bytes():
    """~3/4 of per-core VMEM: ~96 MiB on v5e/v6e, ~48 MiB on v7x."""
    try:
        cap = int(pltpu.get_tpu_info().vmem_capacity_bytes)
    except Exception:
        cap = 64 * 1024 * 1024  # conservative v7x per-TensorCore default
    return max(32 * 1024 * 1024, min(cap * 3 // 4, 96 * 1024 * 1024))


# ------------------------------ Pallas kernel ------------------------------ #

def _multi_conv_kernel(x_ref, w_ref, b_ref, m_ref, o_ref, *,
                       convs, Cp, Sp, Wp):
    """Fused `convs` x (3x3 conv + bias + ReLU) for one batch element.

    Layout: channels on sublanes, flattened padded spatial (Sp) on lanes.

    x_ref: (Cp, Sp)              bf16  padded activations (zero ring + tail).
    w_ref: (convs, 3, Cp, 3*Cp)  bf16  weights, w[l, kh, co, kw*Cp + ci].
    b_ref: (convs, Cp, 1)        f32   bias per layer / output channel.
    m_ref: (1, Sp)               f32   interior mask (1 inside, 0 ring/tail).
    o_ref: (Cp, Sp)              bf16  last layer's activations (same layout).
    """
    mask = m_ref[...]                                   # (1, Sp)  f32
    act = x_ref[...].astype(jnp.float32)                # (Cp, Sp) f32

    def tap(a, s):
        # y[:, p] = a[:, p + s]; cyclic lane roll (XLU). Wrapped lanes only
        # reach ring/tail outputs, which the mask re-zeroes.
        if s == 0:
            return a
        return pltpu.roll(a, (-s) % Sp, axis=1)

    for l in range(convs):                              # convs is small/static
        acc = jnp.zeros((Cp, Sp), jnp.float32)
        for kh in range(3):
            # (3*Cp, Sp) slab for this kernel row; rows ordered (kw, ci) to
            # match the weight packing. Sublane concat offsets are multiples
            # of Cp (>= 16), i.e. tile aligned.
            slab = jnp.concatenate(
                [tap(act, (kh - 1) * Wp + (kw - 1)) for kw in range(3)],
                axis=0)
            # bf16 x bf16 MXU matmul, f32 accumulate. M=Cp, K=3*Cp, N=Sp:
            # the big Sp dimension is on the MXU lane/N axis.
            acc = acc + jnp.dot(w_ref[l, kh], slab.astype(jnp.bfloat16),
                                preferred_element_type=jnp.float32)
        # Bias + ReLU in f32, then re-zero the ring/tail so the result is a
        # valid pre-padded input for the next layer.
        act = jnp.maximum(acc + b_ref[l], 0.0) * mask

    o_ref[...] = act.astype(o_ref.dtype)


# ------------------------------ pallas_call wrapper ------------------------ #

def _multi_conv_pallas(xf, w_all, b_all, mask, *, Wp):
    N, Cp, Sp = xf.shape
    convs = w_all.shape[0]
    kernel = functools.partial(_multi_conv_kernel,
                               convs=convs, Cp=Cp, Sp=Sp, Wp=Wp)
    return pl.pallas_call(
        kernel,
        out_shape=jax.ShapeDtypeStruct((N, Cp, Sp), jnp.bfloat16),
        grid=(N,),
        in_specs=[
            pl.BlockSpec((pl.Squeezed(), Cp, Sp), lambda n: (n, 0, 0)),
            # Constant block index -> weights / bias / mask stay resident.
            pl.BlockSpec((convs, 3, Cp, 3 * Cp), lambda n: (0, 0, 0, 0)),
            pl.BlockSpec((convs, Cp, 1), lambda n: (0, 0, 0)),
            pl.BlockSpec((1, Sp), lambda n: (0, 0)),
        ],
        out_specs=pl.BlockSpec((pl.Squeezed(), Cp, Sp), lambda n: (n, 0, 0)),
        compiler_params=pltpu.CompilerParams(
            dimension_semantics=("parallel",),
            vmem_limit_bytes=_vmem_limit_bytes(),
        ),
    )(xf, w_all, b_all, mask)


# ---------------------------- Parameter creation --------------------------- #

def make_multi_conv_params(key, in_ch, out_ch, convs=2, k=3):
    """Matches multi_conv(in_ch, out_ch, convs, k=3, s=1, p=1, d=1)."""
    keys = jax.random.split(key, convs)
    params = []
    cin = in_ch
    for kk in keys:
        k_w, k_b = jax.random.split(kk)
        fan_in = k * k * cin
        scale = (2.0 / fan_in) ** 0.5
        w = jax.random.normal(k_w, (k, k, cin, out_ch), jnp.float32) * scale
        b = jax.random.normal(k_b, (out_ch,), jnp.float32) * 0.01
        params.append({"w": w, "b": b})
        cin = out_ch
    return params


# ------------------------------- Forward pass ------------------------------ #

@jax.jit
def multi_conv_forward(params, x_nchw):
    """x_nchw: (N, Cin, H, W) -> (N, Cout, H, W)  (k=3, s=1, p=1, d=1)."""
    N, Cin, H, W = x_nchw.shape
    convs = len(params)
    Cout = params[-1]["w"].shape[-1]
    Hp, Wp = H + 2, W + 2
    Sp = _round_up(Hp * Wp, 128)            # lane axis: multiple of 128
    Cp = _round_up(max(Cin, Cout), 16)      # sublane axis: bf16 tile of 16

    # Pack / pad all layers to a uniform (Cp, 9*Cp) contraction so one fused
    # kernel loops over layers. Padded channels carry zero weights & bias, so
    # they contribute nothing (layer 1 pays a little extra MXU work, which has
    # plenty of slack at these channel counts).
    w_list, b_list = [], []
    for prm in params:
        w = prm["w"]                                      # (3, 3, ci, co) HWIO
        ci, co = w.shape[2], w.shape[3]
        w = jnp.pad(w, ((0, 0), (0, 0), (0, Cp - ci), (0, Cp - co)))
        # -> (kh, co, kw, ci) -> (3, Cp, 3*Cp), column index = kw*Cp + ci.
        w = jnp.transpose(w, (0, 3, 1, 2)).reshape(3, Cp, 3 * Cp)
        w_list.append(w)
        b_list.append(jnp.pad(prm["b"], (0, Cp - co)).reshape(Cp, 1))
    w_all = jnp.stack(w_list).astype(jnp.bfloat16)        # (convs, 3, Cp, 3Cp)
    b_all = jnp.stack(b_list).astype(jnp.float32)         # (convs, Cp, 1)

    # One halo pad + flatten; channels stay leading (no NCHW->NHWC transpose).
    xp = jnp.pad(x_nchw, ((0, 0), (0, 0), (1, 1), (1, 1)))    # (N, Cin, Hp, Wp)
    xf = xp.reshape(N, Cin, Hp * Wp)
    xf = jnp.pad(xf, ((0, 0), (0, Cp - Cin), (0, Sp - Hp * Wp)))
    xf = xf.astype(jnp.bfloat16)                              # (N, Cp, Sp)

    # Lane-dense interior mask (1 inside the image, 0 on the ring / tail).
    p = jnp.arange(Sp)
    row, col = p // Wp, p % Wp
    mask = ((row >= 1) & (row <= Hp - 2) & (col >= 1) & (col <= Wp - 2)
            & (p < Hp * Wp)).astype(jnp.float32).reshape(1, Sp)

    out = _multi_conv_pallas(xf, w_all, b_all, mask, Wp=Wp)   # (N, Cp, Sp)
    out = out[:, :Cout, :Hp * Wp].reshape(N, Cout, Hp, Wp)[:, :, 1:-1, 1:-1]
    return out.astype(x_nchw.dtype)


# ------------------------------ Pure-JAX check ----------------------------- #

def _reference_forward(params, x_nchw):
    """Reference mirroring the kernel's bf16 quantization points."""
    def q(a):
        return a.astype(jnp.bfloat16).astype(jnp.float32)

    x = q(jnp.transpose(x_nchw, (0, 2, 3, 1)))
    for prm in params:
        y = lax.conv_general_dilated(
            x, q(prm["w"]), window_strides=(1, 1), padding=((1, 1), (1, 1)),
            dimension_numbers=("NHWC", "HWIO", "NHWC"),
            precision=lax.Precision.HIGHEST)
        x = q(jnp.maximum(y + prm["b"], 0.0))
    return jnp.transpose(x, (0, 3, 1, 2))


# ----------------------------------- Main ---------------------------------- #

if __name__ == "__main__":
    key = jax.random.PRNGKey(0)
    k_params, k_x = jax.random.split(key)

    batch, in_ch, out_ch, spatial = 2, 4, 32, 16
    params = make_multi_conv_params(k_params, in_ch, out_ch, convs=2)
    x = jax.random.normal(k_x, (batch, in_ch, spatial, spatial), jnp.float32)

    out = jax.block_until_ready(multi_conv_forward(params, x))
    assert out.shape == (batch, out_ch, spatial, spatial), out.shape
    assert bool(jnp.all(jnp.isfinite(out)))

    ref = jax.block_until_ready(_reference_forward(params, x))
    err = float(jnp.max(jnp.abs(out - ref) / (1.0 + jnp.abs(ref))))
    assert err < 3e-2, f"mismatch vs reference: {err}"

    print("KERNEL_OK")
</pallas_src>

<mosaic_0001>
module attributes {stable_mosaic.version = 11 : i64} {
  func.func @_multi_conv_kernel(%arg0: i32, %arg1: memref<1x32x384xbf16, #tpu.memory_space<vmem>>, %arg2: memref<2x3x32x96xbf16, #tpu.memory_space<vmem>>, %arg3: memref<2x32x1xf32, #tpu.memory_space<vmem>>, %arg4: memref<1x384xf32, #tpu.memory_space<vmem>>, %arg5: memref<1x32x384xbf16, #tpu.memory_space<vmem>>) attributes {dimension_semantics = [#tpu.dimension_semantics<parallel>], iteration_bounds = array<i64: 2>, scalar_prefetch = 0 : i64, scratch_operands = 0 : i64, tpu.core_type = #tpu.core_type<tc>, window_params = [{transform_indices = @transform_0, window_bounds = array<i64: 1, 32, 384>}, {pipeline_mode = #tpu.pipeline_mode<synchronous>, transform_indices = @transform_1, window_bounds = array<i64: 2, 3, 32, 96>}, {pipeline_mode = #tpu.pipeline_mode<synchronous>, transform_indices = @transform_2, window_bounds = array<i64: 2, 32, 1>}, {pipeline_mode = #tpu.pipeline_mode<synchronous>, transform_indices = @transform_3, window_bounds = array<i64: 1, 384>}, {transform_indices = @transform_4, window_bounds = array<i64: 1, 32, 384>}]} {
    %c0 = arith.constant 0 : index
    %c0_0 = arith.constant 0 : index
    %0 = vector.load %arg4[%c0, %c0_0] : memref<1x384xf32, #tpu.memory_space<vmem>>, vector<1x384xf32>
    %c0_1 = arith.constant 0 : index
    %c0_2 = arith.constant 0 : index
    %c0_3 = arith.constant 0 : index
    %1 = vector.load %arg1[%c0_1, %c0_2, %c0_3] : memref<1x32x384xbf16, #tpu.memory_space<vmem>>, vector<1x32x384xbf16>
    %2 = vector.shape_cast %1 : vector<1x32x384xbf16> to vector<32x384xbf16>
    %3 = arith.extf %2 : vector<32x384xbf16> to vector<32x384xf32>
    %cst = arith.constant 0.000000e+00 : f32
    %4 = vector.broadcast %cst : f32 to vector<32x384xf32>
    %c19_i32 = arith.constant 19 : i32
    %5 = tpu.dynamic_rotate %3 by %c19_i32 dim 1 : vector<32x384xf32>, i32 -> vector<32x384xf32>
    %c18_i32 = arith.constant 18 : i32
    %6 = tpu.dynamic_rotate %3 by %c18_i32 dim 1 : vector<32x384xf32>, i32 -> vector<32x384xf32>
    %c17_i32 = arith.constant 17 : i32
    %7 = tpu.dynamic_rotate %3 by %c17_i32 dim 1 : vector<32x384xf32>, i32 -> vector<32x384xf32>
    %8 = tpu.concatenate %5, %6, %7 in 0 : vector<32x384xf32>, vector<32x384xf32>, vector<32x384xf32> -> vector<96x384xf32>
    %c0_4 = arith.constant 0 : index
    %c0_5 = arith.constant 0 : index
    %c0_6 = arith.constant 0 : index
    %c0_7 = arith.constant 0 : index
    %9 = vector.load %arg2[%c0_4, %c0_5, %c0_6, %c0_7] : memref<2x3x32x96xbf16, #tpu.memory_space<vmem>>, vector<1x1x32x96xbf16>
    %10 = vector.shape_cast %9 : vector<1x1x32x96xbf16> to vector<32x96xbf16>
    %11 = arith.truncf %8 : vector<96x384xf32> to vector<96x384xbf16>
    %cst_8 = arith.constant dense<0.000000e+00> : vector<32x384xf32>
    %12 = tpu.matmul %10, %11, %cst_8 {dimension_numbers = #tpu.dot_dimension_numbers<[1], [0], [0], [1], [0, 0, 1, 1], [], []>} : vector<32x96xbf16>, vector<96x384xbf16>, vector<32x384xf32> -> vector<32x384xf32>
    %13 = arith.addf %4, %12 : vector<32x384xf32>
    %c1_i32 = arith.constant 1 : i32
    %14 = tpu.dynamic_rotate %3 by %c1_i32 dim 1 : vector<32x384xf32>, i32 -> vector<32x384xf32>
    %c383_i32 = arith.constant 383 : i32
    %15 = tpu.dynamic_rotate %3 by %c383_i32 dim 1 : vector<32x384xf32>, i32 -> vector<32x384xf32>
    %16 = tpu.concatenate %14, %3, %15 in 0 : vector<32x384xf32>, vector<32x384xf32>, vector<32x384xf32> -> vector<96x384xf32>
    %c0_9 = arith.constant 0 : index
    %c1 = arith.constant 1 : index
    %c0_10 = arith.constant 0 : index
    %c0_11 = arith.constant 0 : index
    %17 = vector.load %arg2[%c0_9, %c1, %c0_10, %c0_11] : memref<2x3x32x96xbf16, #tpu.memory_space<vmem>>, vector<1x1x32x96xbf16>
    %18 = vector.shape_cast %17 : vector<1x1x32x96xbf16> to vector<32x96xbf16>
    %19 = arith.truncf %16 : vector<96x384xf32> to vector<96x384xbf16>
    %cst_12 = arith.constant dense<0.000000e+00> : vector<32x384xf32>
    %20 = tpu.matmul %18, %19, %cst_12 {dimension_numbers = #tpu.dot_dimension_numbers<[1], [0], [0], [1], [0, 0, 1, 1], [], []>} : vector<32x96xbf16>, vector<96x384xbf16>, vector<32x384xf32> -> vector<32x384xf32>
    %21 = arith.addf %13, %20 : vector<32x384xf32>
    %c367_i32 = arith.constant 367 : i32
    %22 = tpu.dynamic_rotate %3 by %c367_i32 dim 1 : vector<32x384xf32>, i32 -> vector<32x384xf32>
    %c366_i32 = arith.constant 366 : i32
    %23 = tpu.dynamic_rotate %3 by %c366_i32 dim 1 : vector<32x384xf32>, i32 -> vector<32x384xf32>
    %c365_i32 = arith.constant 365 : i32
    %24 = tpu.dynamic_rotate %3 by %c365_i32 dim 1 : vector<32x384xf32>, i32 -> vector<32x384xf32>
    %25 = tpu.concatenate %22, %23, %24 in 0 : vector<32x384xf32>, vector<32x384xf32>, vector<32x384xf32> -> vector<96x384xf32>
    %c0_13 = arith.constant 0 : index
    %c2 = arith.constant 2 : index
    %c0_14 = arith.constant 0 : index
    %c0_15 = arith.constant 0 : index
    %26 = vector.load %arg2[%c0_13, %c2, %c0_14, %c0_15] : memref<2x3x32x96xbf16, #tpu.memory_space<vmem>>, vector<1x1x32x96xbf16>
    %27 = vector.shape_cast %26 : vector<1x1x32x96xbf16> to vector<32x96xbf16>
    %28 = arith.truncf %25 : vector<96x384xf32> to vector<96x384xbf16>
    %cst_16 = arith.constant dense<0.000000e+00> : vector<32x384xf32>
    %29 = tpu.matmul %27, %28, %cst_16 {dimension_numbers = #tpu.dot_dimension_numbers<[1], [0], [0], [1], [0, 0, 1, 1], [], []>} : vector<32x96xbf16>, vector<96x384xbf16>, vector<32x384xf32> -> vector<32x384xf32>
    %30 = arith.addf %21, %29 : vector<32x384xf32>
    %c0_17 = arith.constant 0 : index
    %c0_18 = arith.constant 0 : index
    %c0_19 = arith.constant 0 : index
    %31 = vector.load %arg3[%c0_17, %c0_18, %c0_19] : memref<2x32x1xf32, #tpu.memory_space<vmem>>, vector<1x32x1xf32>
    %32 = vector.shape_cast %31 : vector<1x32x1xf32> to vector<32x1xf32>
    %33 = vector.broadcast %32 : vector<32x1xf32> to vector<32x384xf32>
    %34 = arith.addf %30, %33 : vector<32x384xf32>
    %cst_20 = arith.constant 0.000000e+00 : f32
    %35 = vector.broadcast %cst_20 : f32 to vector<32x384xf32>
    %36 = arith.maximumf %34, %35 : vector<32x384xf32>
    %37 = vector.broadcast %0 : vector<1x384xf32> to vector<32x384xf32>
    %38 = arith.mulf %36, %37 : vector<32x384xf32>
    %cst_21 = arith.constant 0.000000e+00 : f32
    %39 = vector.broadcast %cst_21 : f32 to vector<32x384xf32>
    %c19_i32_22 = arith.constant 19 : i32
    %40 = tpu.dynamic_rotate %38 by %c19_i32_22 dim 1 : vector<32x384xf32>, i32 -> vector<32x384xf32>
    %c18_i32_23 = arith.constant 18 : i32
    %41 = tpu.dynamic_rotate %38 by %c18_i32_23 dim 1 : vector<32x384xf32>, i32 -> vector<32x384xf32>
    %c17_i32_24 = arith.constant 17 : i32
    %42 = tpu.dynamic_rotate %38 by %c17_i32_24 dim 1 : vector<32x384xf32>, i32 -> vector<32x384xf32>
    %43 = tpu.concatenate %40, %41, %42 in 0 : vector<32x384xf32>, vector<32x384xf32>, vector<32x384xf32> -> vector<96x384xf32>
    %c1_25 = arith.constant 1 : index
    %c0_26 = arith.constant 0 : index
    %c0_27 = arith.constant 0 : index
    %c0_28 = arith.constant 0 : index
    %44 = vector.load %arg2[%c1_25, %c0_26, %c0_27, %c0_28] : memref<2x3x32x96xbf16, #tpu.memory_space<vmem>>, vector<1x1x32x96xbf16>
    %45 = vector.shape_cast %44 : vector<1x1x32x96xbf16> to vector<32x96xbf16>
    %46 = arith.truncf %43 : vector<96x384xf32> to vector<96x384xbf16>
    %cst_29 = arith.constant dense<0.000000e+00> : vector<32x384xf32>
    %47 = tpu.matmul %45, %46, %cst_29 {dimension_numbers = #tpu.dot_dimension_numbers<[1], [0], [0], [1], [0, 0, 1, 1], [], []>} : vector<32x96xbf16>, vector<96x384xbf16>, vector<32x384xf32> -> vector<32x384xf32>
    %48 = arith.addf %39, %47 : vector<32x384xf32>
    %c1_i32_30 = arith.constant 1 : i32
    %49 = tpu.dynamic_rotate %38 by %c1_i32_30 dim 1 : vector<32x384xf32>, i32 -> vector<32x384xf32>
    %c383_i32_31 = arith.constant 383 : i32
    %50 = tpu.dynamic_rotate %38 by %c383_i32_31 dim 1 : vector<32x384xf32>, i32 -> vector<32x384xf32>
    %51 = tpu.concatenate %49, %38, %50 in 0 : vector<32x384xf32>, vector<32x384xf32>, vector<32x384xf32> -> vector<96x384xf32>
    %c1_32 = arith.constant 1 : index
    %c1_33 = arith.constant 1 : index
    %c0_34 = arith.constant 0 : index
    %c0_35 = arith.constant 0 : index
    %52 = vector.load %arg2[%c1_32, %c1_33, %c0_34, %c0_35] : memref<2x3x32x96xbf16, #tpu.memory_space<vmem>>, vector<1x1x32x96xbf16>
    %53 = vector.shape_cast %52 : vector<1x1x32x96xbf16> to vector<32x96xbf16>
    %54 = arith.truncf %51 : vector<96x384xf32> to vector<96x384xbf16>
    %cst_36 = arith.constant dense<0.000000e+00> : vector<32x384xf32>
    %55 = tpu.matmul %53, %54, %cst_36 {dimension_numbers = #tpu.dot_dimension_numbers<[1], [0], [0], [1], [0, 0, 1, 1], [], []>} : vector<32x96xbf16>, vector<96x384xbf16>, vector<32x384xf32> -> vector<32x384xf32>
    %56 = arith.addf %48, %55 : vector<32x384xf32>
    %c367_i32_37 = arith.constant 367 : i32
    %57 = tpu.dynamic_rotate %38 by %c367_i32_37 dim 1 : vector<32x384xf32>, i32 -> vector<32x384xf32>
    %c366_i32_38 = arith.constant 366 : i32
    %58 = tpu.dynamic_rotate %38 by %c366_i32_38 dim 1 : vector<32x384xf32>, i32 -> vector<32x384xf32>
    %c365_i32_39 = arith.constant 365 : i32
    %59 = tpu.dynamic_rotate %38 by %c365_i32_39 dim 1 : vector<32x384xf32>, i32 -> vector<32x384xf32>
    %60 = tpu.concatenate %57, %58, %59 in 0 : vector<32x384xf32>, vector<32x384xf32>, vector<32x384xf32> -> vector<96x384xf32>
    %c1_40 = arith.constant 1 : index
    %c2_41 = arith.constant 2 : index
    %c0_42 = arith.constant 0 : index
    %c0_43 = arith.constant 0 : index
    %61 = vector.load %arg2[%c1_40, %c2_41, %c0_42, %c0_43] : memref<2x3x32x96xbf16, #tpu.memory_space<vmem>>, vector<1x1x32x96xbf16>
    %62 = vector.shape_cast %61 : vector<1x1x32x96xbf16> to vector<32x96xbf16>
    %63 = arith.truncf %60 : vector<96x384xf32> to vector<96x384xbf16>
    %cst_44 = arith.constant dense<0.000000e+00> : vector<32x384xf32>
    %64 = tpu.matmul %62, %63, %cst_44 {dimension_numbers = #tpu.dot_dimension_numbers<[1], [0], [0], [1], [0, 0, 1, 1], [], []>} : vector<32x96xbf16>, vector<96x384xbf16>, vector<32x384xf32> -> vector<32x384xf32>
    %65 = arith.addf %56, %64 : vector<32x384xf32>
    %c1_45 = arith.constant 1 : index
    %c0_46 = arith.constant 0 : index
    %c0_47 = arith.constant 0 : index
    %66 = vector.load %arg3[%c1_45, %c0_46, %c0_47] : memref<2x32x1xf32, #tpu.memory_space<vmem>>, vector<1x32x1xf32>
    %67 = vector.shape_cast %66 : vector<1x32x1xf32> to vector<32x1xf32>
    %68 = vector.broadcast %67 : vector<32x1xf32> to vector<32x384xf32>
    %69 = arith.addf %65, %68 : vector<32x384xf32>
    %cst_48 = arith.constant 0.000000e+00 : f32
    %70 = vector.broadcast %cst_48 : f32 to vector<32x384xf32>
    %71 = arith.maximumf %69, %70 : vector<32x384xf32>
    %72 = vector.broadcast %0 : vector<1x384xf32> to vector<32x384xf32>
    %73 = arith.mulf %71, %72 : vector<32x384xf32>
    %74 = arith.truncf %73 : vector<32x384xf32> to vector<32x384xbf16>
    %c0_49 = arith.constant 0 : index
    %c0_50 = arith.constant 0 : index
    %c0_51 = arith.constant 0 : index
    %75 = vector.load %arg5[%c0_49, %c0_50, %c0_51] : memref<1x32x384xbf16, #tpu.memory_space<vmem>>, vector<1x32x384xbf16>
    %76 = vector.shape_cast %75 : vector<1x32x384xbf16> to vector<32x384xbf16>
    %77 = vector.shape_cast %74 : vector<32x384xbf16> to vector<1x32x384xbf16>
    tpu.vector_store %arg5[%c0_49, %c0_50, %c0_51], %77 {strides = array<i32>} : memref<1x32x384xbf16, #tpu.memory_space<vmem>>, vector<1x32x384xbf16>,
    return
  }
  func.func @transform_0(%arg0: i32) -> (i32, i32, i32) {
    %c0_i32 = arith.constant 0 : i32
    %c0_i32_0 = arith.constant 0 : i32
    %c0_i32_1 = arith.constant 0 : i32
    return %arg0, %c0_i32, %c0_i32_0 : i32, i32, i32
  }
  func.func @transform_1(%arg0: i32) -> (i32, i32, i32, i32) {
    %c0_i32 = arith.constant 0 : i32
    %c0_i32_0 = arith.constant 0 : i32
    %c0_i32_1 = arith.constant 0 : i32
    %c0_i32_2 = arith.constant 0 : i32
    %c0_i32_3 = arith.constant 0 : i32
    return %c0_i32, %c0_i32_0, %c0_i32_1, %c0_i32_2 : i32, i32, i32, i32
  }
  func.func @transform_2(%arg0: i32) -> (i32, i32, i32) {
    %c0_i32 = arith.constant 0 : i32
    %c0_i32_0 = arith.constant 0 : i32
    %c0_i32_1 = arith.constant 0 : i32
    %c0_i32_2 = arith.constant 0 : i32
    return %c0_i32, %c0_i32_0, %c0_i32_1 : i32, i32, i32
  }
  func.func @transform_3(%arg0: i32) -> (i32, i32) {
    %c0_i32 = arith.constant 0 : i32
    %c0_i32_0 = arith.constant 0 : i32
    %c0_i32_1 = arith.constant 0 : i32
    return %c0_i32, %c0_i32_0 : i32, i32
  }
  func.func @transform_4(%arg0: i32) -> (i32, i32, i32) {
    %c0_i32 = arith.constant 0 : i32
    %c0_i32_0 = arith.constant 0 : i32
    %c0_i32_1 = arith.constant 0 : i32
    return %arg0, %c0_i32, %c0_i32_0 : i32, i32, i32
  }
}

</mosaic_0001>

<llo_original>
// kernel: multi_conv_forward.1
$region0: #{multi_conv_forward.1}
  #allocation0 [shape = 'u32[]', space=smem, size = 0x4, offset = 0x4, fixed_abs, tag = 'smem constant byte address 0x4 - core index']
  #allocation1 [shape = 'u32[144,128]{1,0:T(1,128)}', space=vmem, size = 0x12000, scoped, tag = 'internal scratch']
  %s0 = inlined_call_operand.vmem [shape: bf16[2,32,384], index: 0, kind: input, shape index: {}]
  %s1 = inlined_call_operand.vmem [shape: bf16[2,3,32,96], index: 1, kind: input, shape index: {}]
  %s2 = inlined_call_operand.vmem [shape: f32[2,32,1], index: 2, kind: input, shape index: {}]
  %s3 = inlined_call_operand.vmem [shape: f32[1,384], index: 3, kind: input, shape index: {}]
  %s4 = inlined_call_operand.vmem [shape: bf16[2,32,384], index: 4, kind: output, shape index: {}]
  %s5 = sld [smem:[#allocation0]]
  $region49: #{multi_conv_forward.1} parent=0
    _
  %s7 = ssub.s32 1, %s5
  %s8 = scalar_select 0, %s7, %s5
  loop: start=0, step=1, limit=4
  $region2: #{multi_conv_forward.1} parent=0 // loop_pre_header
    _
  $region3: #{multi_conv_forward.1} parent=0 // loop_header
    %s10 = sphi 0, %s14
    %p11 = scmp.ge.s32.totalorder %s10, 4
    %s20 = sphi 0, %s22
    %s23 = sphi 0, %s20
    %s24 = sphi 0, %s23
    %s40 = sphi 0, %s24
    %s44 = sphi 0, %s44
    %s46 = sphi 0, %s44
    %s47 = sphi 0, %s46
    %s61 = sphi 0, %s47
    %s65 = sphi 0, %s65
    %s67 = sphi 0, %s65
    %s68 = sphi 0, %s67
    %s82 = sphi 0, %s68
    %s86 = sphi 0, %s86
    %s88 = sphi 0, %s86
    %s89 = sphi 0, %s88
    %s103 = sphi 0, %s89
    %s109 = sphi 0, %s111
    %s112 = sphi 0, %s109
    %s113 = sphi 0, %s112
    %s129 = sphi 0, %s113
  $region4: #{multi_conv_forward.1} parent=0 // loop_header_branch
    %13 = sbr.rel (%p11) target = $region8
  $region5: #{multi_conv_forward.1} parent=0 // loop_body
    %s15 = ssub.s32 %s10, 1
    %s16 = ssub.s32 %s10, 2
    %s17 = sadd.s32 %s10, 1
    %s18 = ssub.s32 %s10, %s17
    %p19 = scmp.eq.s32.totalorder %s18, 0
    %s21 = sadd.s32 %s20, 1
    %s22 = scalar_select %p19, %s20, %s21
    %p25 = pneg %p19
    %p26 = scmp.eq.s32.totalorder %s10, 1
    %p27 = por %p25, %p26
    %p28 = scmp.ne.s32.totalorder %s20, %s23
    %p29 = scmp.eq.s32.totalorder %s10, 0
    %p30 = por %p28, %p29
    %p31 = scmp.ne.s32.totalorder %s20, %s23
    %p32 = scmp.eq.s32.totalorder %s15, 1
    %p33 = por %p31, %p32
    %p34 = scmp.ne.s32.totalorder %s23, %s24
    %p35 = scmp.eq.s32.totalorder %s15, 0
    %p36 = por %p34, %p35
    %p37 = scmp.ne.s32.totalorder %s23, %s24
    %p38 = scmp.eq.s32.totalorder %s16, 1
    %p39 = por %p37, %p38
    %p41 = scmp.ne.s32.totalorder %s24, %s40
    %p42 = scmp.eq.s32.totalorder %s16, 0
    %p43 = por %p41, %p42
    %s45 = sadd.s32 %s44, 1
    %p48 = scmp.eq.s32.totalorder %s10, 1
    %p49 = scmp.ne.s32.totalorder %s44, %s46
    %p50 = scmp.eq.s32.totalorder %s10, 0
    %p51 = por %p49, %p50
    %p52 = scmp.ne.s32.totalorder %s44, %s46
    %p53 = scmp.eq.s32.totalorder %s15, 1
    %p54 = por %p52, %p53
    %p55 = scmp.ne.s32.totalorder %s46, %s47
    %p56 = scmp.eq.s32.totalorder %s15, 0
    %p57 = por %p55, %p56
    %p58 = scmp.ne.s32.totalorder %s46, %s47
    %p59 = scmp.eq.s32.totalorder %s16, 1
    %p60 = por %p58, %p59
    %p62 = scmp.ne.s32.totalorder %s47, %s61
    %p63 = scmp.eq.s32.totalorder %s16, 0
    %p64 = por %p62, %p63
    %s66 = sadd.s32 %s65, 1
    %p69 = scmp.eq.s32.totalorder %s10, 1
    %p70 = scmp.ne.s32.totalorder %s65, %s67
    %p71 = scmp.eq.s32.totalorder %s10, 0
    %p72 = por %p70, %p71
    %p73 = scmp.ne.s32.totalorder %s65, %s67
    %p74 = scmp.eq.s32.totalorder %s15, 1
    %p75 = por %p73, %p74
    %p76 = scmp.ne.s32.totalorder %s67, %s68
    %p77 = scmp.eq.s32.totalorder %s15, 0
    %p78 = por %p76, %p77
    %p79 = scmp.ne.s32.totalorder %s67, %s68
    %p80 = scmp.eq.s32.totalorder %s16, 1
    %p81 = por %p79, %p80
    %p83 = scmp.ne.s32.totalorder %s68, %s82
    %p84 = scmp.eq.s32.totalorder %s16, 0
    %p85 = por %p83, %p84
    %s87 = sadd.s32 %s86, 1
    %p90 = scmp.eq.s32.totalorder %s10, 1
    %p91 = scmp.ne.s32.totalorder %s86, %s88
    %p92 = scmp.eq.s32.totalorder %s10, 0
    %p93 = por %p91, %p92
    %p94 = scmp.ne.s32.totalorder %s86, %s88
    %p95 = scmp.eq.s32.totalorder %s15, 1
    %p96 = por %p94, %p95
    %p97 = scmp.ne.s32.totalorder %s88, %s89
    %p98 = scmp.eq.s32.totalorder %s15, 0
    %p99 = por %p97, %p98
    %p100 = scmp.ne.s32.totalorder %s88, %s89
    %p101 = scmp.eq.s32.totalorder %s16, 1
    %p102 = por %p100, %p101
    %p104 = scmp.ne.s32.totalorder %s89, %s103
    %p105 = scmp.eq.s32.totalorder %s16, 0
    %p106 = por %p104, %p105
    %s107 = ssub.s32 %s10, %s17
    %p108 = scmp.eq.s32.totalorder %s107, 0
    %s110 = sadd.s32 %s109, 1
    %s111 = scalar_select %p108, %s109, %s110
    %p114 = pneg %p108
    %p115 = scmp.eq.s32.totalorder %s10, 1
    %p116 = por %p114, %p115
    %p117 = scmp.ne.s32.totalorder %s109, %s112
    %p118 = scmp.eq.s32.totalorder %s10, 0
    %p119 = por %p117, %p118
    %p120 = scmp.ne.s32.totalorder %s109, %s112
    %p121 = scmp.eq.s32.totalorder %s15, 1
    %p122 = por %p120, %p121
    %p123 = scmp.ne.s32.totalorder %s112, %s113
    %p124 = scmp.eq.s32.totalorder %s15, 0
    %p125 = por %p123, %p124
    %p126 = scmp.ne.s32.totalorder %s112, %s113
    %p127 = scmp.eq.s32.totalorder %s16, 1
    %p128 = por %p126, %p127
    %p130 = scmp.ne.s32.totalorder %s113, %s129
    %p131 = scmp.eq.s32.totalorder %s16, 0
    %p132 = por %p130, %p131
    %p133 = scmp.le.s32.totalorder 1, %s10
    %p134 = scmp.lt.s32.totalorder %s10, 3
    %p135 = pnand %p133, %p134
    %p136 = pneg %p135
    // Predicated region
    $region9: #{multi_conv_forward.1} parent=5 // pred_check
      _
    $region10: #{multi_conv_forward.1} parent=5 // pred_check_branch
      %138 = sbr.rel (%p135) target = $region12
    $region11: #{multi_conv_forward.1} parent=5 // pred_region
      %s139 = ssub.s32 %s10, 1
      // Predicated region
      $region13: #{multi_conv_forward.1} parent=11 // pred_check
        %p140 = pneg %p57
      $region14: #{multi_conv_forward.1} parent=11 // pred_check_branch
        %142 = sbr.rel (%p140) target = $region16
      $region15: #{multi_conv_forward.1} parent=11 // pred_region
        _
      $region16: #{multi_conv_forward.1} parent=11 // pred_fallthru
        _
      // Predicated region
      $region17: #{multi_conv_forward.1} parent=11 // pred_check
        %p143 = pneg %p78
      $region18: #{multi_conv_forward.1} parent=11 // pred_check_branch
        %145 = sbr.rel (%p143) target = $region20
      $region19: #{multi_conv_forward.1} parent=11 // pred_region
        _
      $region20: #{multi_conv_forward.1} parent=11 // pred_fallthru
        _
      // Predicated region
      $region21: #{multi_conv_forward.1} parent=11 // pred_check
        %p146 = pneg %p99
      $region22: #{multi_conv_forward.1} parent=11 // pred_check_branch
        %148 = sbr.rel (%p146) target = $region24
      $region23: #{multi_conv_forward.1} parent=11 // pred_region
        _
      $region24: #{multi_conv_forward.1} parent=11 // pred_fallthru
        _
    $region12: #{multi_conv_forward.1} parent=5 // pred_fallthru
      _
    %p149 = scmp.lt.s32.totalorder %s10, 2
    // Predicated region
    $region25: #{multi_conv_forward.1} parent=5 // pred_check
      %p150 = pneg %p149
    $region26: #{multi_conv_forward.1} parent=5 // pred_check_branch
      %152 = sbr.rel (%p150) target = $region28
    $region27: #{multi_conv_forward.1} parent=5 // pred_region
      // Predicated region
      $region29: #{multi_conv_forward.1} parent=27 // pred_check
        %p153 = pneg %p30
      $region30: #{multi_conv_forward.1} parent=27 // pred_check_branch
        %155 = sbr.rel (%p153) target = $region32
      $region31: #{multi_conv_forward.1} parent=27 // pred_region
        %p156 = scmp.lt.s32.totalorder %s10, 1
        %s157 = scalar_select %p156, %s10, 1
        %s158 = smul.addr %s157, 12
        %s159 = smul.addr %s158, 4
        %s160 = scalar_lea.vmem %s0, %s159
      $region32: #{multi_conv_forward.1} parent=27 // pred_fallthru
        _
    $region28: #{multi_conv_forward.1} parent=5 // pred_fallthru
      _
    %p161 = scmp.le.s32.totalorder 1, %s10
    %p162 = scmp.lt.s32.totalorder %s10, 3
    %p163 = pnand %p161, %p162
    %p164 = pneg %p163
    // Predicated region
    $region33: #{multi_conv_forward.1} parent=5 // pred_check
      _
    $region34: #{multi_conv_forward.1} parent=5 // pred_check_branch
      %166 = sbr.rel (%p163) target = $region36
    $region35: #{multi_conv_forward.1} parent=5 // pred_region
      %s167 = ssub.s32 %s10, 1
      %p168 = scmp.lt.s32.totalorder %s15, 1
      %s169 = scalar_select %p168, %s15, 1
      %s170 = smul.addr %s169, 12
      %s171 = smul.addr %s170, 4
      %s172 = scalar_lea.vmem %s0, %s171
      %p173 = pneg %p36
      %p174 = pneg %p33
      %p175 = pneg %p57
      %p176 = pneg %p54
      %p177 = pneg %p78
      %p178 = pneg %p75
      %p179 = pneg %p99
      %p180 = pneg %p96
      %p181 = pneg %p125
      %p182 = pneg %p122
      %p183 = scmp.lt.s32.totalorder %s15, 1
      %s184 = scalar_select %p183, %s15, 1
      %s185 = smul.addr %s184, 12
      %s186 = smul.addr %s185, 4
      %s187 = scalar_lea.vmem %s4, %s186
      %p188 = scmp.lt.s32.totalorder %s15, 1
      %s189 = scalar_select %p188, %s15, 1
      %s190 = smul.addr %s189, 12
      %s191 = smul.addr %s190, 4
      %s192 = scalar_lea.vmem %s0, %s191
      %p193 = scmp.lt.s32.totalorder %s15, 1
      %s194 = scalar_select %p193, %s15, 1
      %s195 = smul.addr %s194, 12
      %s196 = smul.addr %s195, 4
      %s197 = scalar_lea.vmem %s4, %s196
      %v199 = vld [vmem:[%s3] sm:$0x7]
      %v200 = vld [vmem:[%s192] sm:$0xff]
      %v201 = vld [vmem:[%s192 + $0x8] sm:$0xf]
      %v202 = vld [vmem:[%s192 + $0xc] sm:$0xff]
      %v203 = vld [vmem:[%s192 + $0x14] sm:$0xf]
      %v204 = vld [vmem:[%s192 + $0x18] sm:$0xff]
      %v205 = vld [vmem:[%s192 + $0x20] sm:$0xf]
      %v206 = vld [vmem:[%s192 + $0x24] sm:$0xff]
      %v207 = vld [vmem:[%s192 + $0x2c] sm:$0xf]
      %v208 = vunpack.c.l.bf16 %v200
      %v209 = vunpack.c.h.bf16 %v200
      %v210 = vunpack.c.l.bf16 %v201
      %v211 = vunpack.c.l.bf16 %v202
      %v212 = vunpack.c.h.bf16 %v202
      %v213 = vunpack.c.l.bf16 %v203
      %v214 = vunpack.c.l.bf16 %v204
      %v215 = vunpack.c.h.bf16 %v204
      %v216 = vunpack.c.l.bf16 %v205
      %v217 = vunpack.c.l.bf16 %v206
      %v218 = vunpack.c.h.bf16 %v206
      %v219 = vunpack.c.l.bf16 %v207
      %220 = vrot.lane.b32.xlu0 %v208, 19
      %v221 = vpop.permute.xlu0 %220
      %222 = vrot.lane.b32.xlu0 %v211, 19
      %v223 = vpop.permute.xlu0 %222
      %224 = vrot.lane.b32.xlu0 %v214, 19
      %v225 = vpop.permute.xlu0 %224
      %226 = vrot.lane.b32.xlu0 %v217, 19
      %v227 = vpop.permute.xlu0 %226
      %228 = vrot.lane.b32.xlu0 %v209, 19
      %v229 = vpop.permute.xlu0 %228
      %230 = vrot.lane.b32.xlu0 %v212, 19
      %v231 = vpop.permute.xlu0 %230
      %232 = vrot.lane.b32.xlu0 %v215, 19
      %v233 = vpop.permute.xlu0 %232
      %234 = vrot.lane.b32.xlu0 %v218, 19
      %v235 = vpop.permute.xlu0 %234
      %236 = vrot.lane.b32.xlu0 %v210, 19
      %v237 = vpop.permute.xlu0 %236
      %238 = vrot.lane.b32.xlu0 %v213, 19
      %v239 = vpop.permute.xlu0 %238
      %240 = vrot.lane.b32.xlu0 %v216, 19
      %v241 = vpop.permute.xlu0 %240
      %242 = vrot.lane.b32.xlu0 %v219, 19
      %v243 = vpop.permute.xlu0 %242
      %v244 = vlaneseq
      %v245 = vand.u32 %v244, 127
      %vm246 = vcmp.lt.s32.totalorder %v245, 19
      %v247 = vsel %vm246, %v229, %v237
      %v248 = vsel %vm246, %v231, %v239
      %v249 = vsel %vm246, %v233, %v241
      %v250 = vsel %vm246, %v235, %v243
      %v251 = vsel %vm246, %v221, %v229
      %v252 = vsel %vm246, %v223, %v231
      %v253 = vsel %vm246, %v225, %v233
      %v254 = vsel %vm246, %v227, %v235
      %v255 = vsel %vm246, %v237, %v221
      %v256 = vsel %vm246, %v239, %v223
      %v257 = vsel %vm246, %v241, %v225
      %v258 = vsel %vm246, %v243, %v227
      %259 = vrot.lane.b32.xlu0 %v208, 18
      %v260 = vpop.permute.xlu0 %259
      %261 = vrot.lane.b32.xlu0 %v211, 18
      %v262 = vpop.permute.xlu0 %261
      %263 = vrot.lane.b32.xlu0 %v214, 18
      %v264 = vpop.permute.xlu0 %263
      %265 = vrot.lane.b32.xlu0 %v217, 18
      %v266 = vpop.permute.xlu0 %265
      %267 = vrot.lane.b32.xlu0 %v209, 18
      %v268 = vpop.permute.xlu0 %267
      %269 = vrot.lane.b32.xlu0 %v212, 18
      %v270 = vpop.permute.xlu0 %269
      %271 = vrot.lane.b32.xlu0 %v215, 18
      %v272 = vpop.permute.xlu0 %271
      %273 = vrot.lane.b32.xlu0 %v218, 18
      %v274 = vpop.permute.xlu0 %273
      %275 = vrot.lane.b32.xlu0 %v210, 18
      %v276 = vpop.permute.xlu0 %275
      %277 = vrot.lane.b32.xlu0 %v213, 18
      %v278 = vpop.permute.xlu0 %277
      %279 = vrot.lane.b32.xlu0 %v216, 18
      %v280 = vpop.permute.xlu0 %279
      %281 = vrot.lane.b32.xlu0 %v219, 18
      %v282 = vpop.permute.xlu0 %281
      %vm283 = vcmp.lt.s32.totalorder %v245, 18
      %v284 = vsel %vm283, %v268, %v276
      %v285 = vsel %vm283, %v270, %v278
      %v286 = vsel %vm283, %v272, %v280
      %v287 = vsel %vm283, %v274, %v282
      %v288 = vsel %vm283, %v260, %v268
      %v289 = vsel %vm283, %v262, %v270
      %v290 = vsel %vm283, %v264, %v272
      %v291 = vsel %vm283, %v266, %v274
      %v292 = vsel %vm283, %v276, %v260
      %v293 = vsel %vm283, %v278, %v262
      %v294 = vsel %vm283, %v280, %v264
      %v295 = vsel %vm283, %v282, %v266
      %296 = vrot.lane.b32.xlu0 %v208, 17
      %v297 = vpop.permute.xlu0 %296
      %298 = vrot.lane.b32.xlu0 %v211, 17
      %v299 = vpop.permute.xlu0 %298
      %300 = vrot.lane.b32.xlu0 %v214, 17
      %v301 = vpop.permute.xlu0 %300
      %302 = vrot.lane.b32.xlu0 %v217, 17
      %v303 = vpop.permute.xlu0 %302
      %304 = vrot.lane.b32.xlu0 %v209, 17
      %v305 = vpop.permute.xlu0 %304
      %306 = vrot.lane.b32.xlu0 %v212, 17
      %v307 = vpop.permute.xlu0 %306
      %308 = vrot.lane.b32.xlu0 %v215, 17
      %v309 = vpop.permute.xlu0 %308
      %310 = vrot.lane.b32.xlu0 %v218, 17
      %v311 = vpop.permute.xlu0 %310
      %312 = vrot.lane.b32.xlu0 %v210, 17
      %v313 = vpop.permute.xlu0 %312
      %314 = vrot.lane.b32.xlu0 %v213, 17
      %v315 = vpop.permute.xlu0 %314
      %316 = vrot.lane.b32.xlu0 %v216, 17
      %v317 = vpop.permute.xlu0 %316
      %318 = vrot.lane.b32.xlu0 %v219, 17
      %v319 = vpop.permute.xlu0 %318
      %vm320 = vcmp.lt.s32.totalorder %v245, 17
      %v321 = vsel %vm320, %v305, %v313
      %v322 = vsel %vm320, %v307, %v315
      %v323 = vsel %vm320, %v309, %v317
      %v324 = vsel %vm320, %v311, %v319
      %v325 = vsel %vm320, %v297, %v305
      %v326 = vsel %vm320, %v299, %v307
      %v327 = vsel %vm320, %v301, %v309
      %v328 = vsel %vm320, %v303, %v311
      %v329 = vsel %vm320, %v313, %v297
      %v330 = vsel %vm320, %v315, %v299
      %v331 = vsel %vm320, %v317, %v301
      %v332 = vsel %vm320, %v319, %v303
      %v333 = vld [vmem:[%s1] sm:$0xf]
      %v334 = vld [vmem:[%s1 + $0x4] sm:$0xf]
      %v335 = vld [vmem:[%s1 + $0x8] sm:$0xf]
      %v336 = vld [vmem:[%s1 + $0xc] sm:$0xf]
      %v337 = vpack.c.bf16 %v256, %v255
      %v338 = vpack.c.bf16 %v252, %v251
      %v339 = vpack.c.bf16 %v248, %v247
      %v340 = vpack.c.bf16 %v258, %v257
      %v341 = vpack.c.bf16 %v254, %v253
      %v342 = vpack.c.bf16 %v250, %v249
      %v343 = vpack.c.bf16 %v293, %v292
      %v344 = vpack.c.bf16 %v289, %v288
      %v345 = vpack.c.bf16 %v285, %v284
      %v346 = vpack.c.bf16 %v295, %v294
      %v347 = vpack.c.bf16 %v291, %v290
      %v348 = vpack.c.bf16 %v287, %v286
      %v349 = vpack.c.bf16 %v330, %v329
      %v350 = vpack.c.bf16 %v326, %v325
      %v351 = vpack.c.bf16 %v322, %v321
      %v352 = vpack.c.bf16 %v332, %v331
      %v353 = vpack.c.bf16 %v328, %v327
      %v354 = vpack.c.bf16 %v324, %v323
      %355 = vrot.lane.b32.xlu0 %v208, 1
      %v356 = vpop.permute.xlu0 %355
      %357 = vrot.lane.b32.xlu0 %v211, 1
      %v358 = vpop.permute.xlu0 %357
      %359 = vrot.lane.b32.xlu0 %v214, 1
      %v360 = vpop.permute.xlu0 %359
      %361 = vrot.lane.b32.xlu0 %v217, 1
      %v362 = vpop.permute.xlu0 %361
      %363 = vrot.lane.b32.xlu0 %v209, 1
      %v364 = vpop.permute.xlu0 %363
      %365 = vrot.lane.b32.xlu0 %v212, 1
      %v366 = vpop.permute.xlu0 %365
      %367 = vrot.lane.b32.xlu0 %v215, 1
      %v368 = vpop.permute.xlu0 %367
      %369 = vrot.lane.b32.xlu0 %v218, 1
      %v370 = vpop.permute.xlu0 %369
      %371 = vrot.lane.b32.xlu0 %v210, 1
      %v372 = vpop.permute.xlu0 %371
      %373 = vrot.lane.b32.xlu0 %v213, 1
      %v374 = vpop.permute.xlu0 %373
      %375 = vrot.lane.b32.xlu0 %v216, 1
      %v376 = vpop.permute.xlu0 %375
      %377 = vrot.lane.b32.xlu0 %v219, 1
      %v378 = vpop.permute.xlu0 %377
      %vm379 = vcmp.lt.s32.totalorder %v245, 1
      %v380 = vsel %vm379, %v364, %v372
      %v381 = vsel %vm379, %v366, %v374
      %v382 = vsel %vm379, %v368, %v376
      %v383 = vsel %vm379, %v370, %v378
      %v384 = vsel %vm379, %v356, %v364
      %v385 = vsel %vm379, %v358, %v366
      %v386 = vsel %vm379, %v360, %v368
      %v387 = vsel %vm379, %v362, %v370
      %v388 = vsel %vm379, %v372, %v356
      %v389 = vsel %vm379, %v374, %v358
      %v390 = vsel %vm379, %v376, %v360
      %v391 = vsel %vm379, %v378, %v362
      %392 = vrot.lane.b32.xlu0 %v208, 127
      %v393 = vpop.permute.xlu0 %392
      %394 = vrot.lane.b32.xlu0 %v211, 127
      %v395 = vpop.permute.xlu0 %394
      %396 = vrot.lane.b32.xlu0 %v214, 127
      %v397 = vpop.permute.xlu0 %396
      %398 = vrot.lane.b32.xlu0 %v217, 127
      %v399 = vpop.permute.xlu0 %398
      %400 = vrot.lane.b32.xlu0 %v209, 127
      %v401 = vpop.permute.xlu0 %400
      %402 = vrot.lane.b32.xlu0 %v212, 127
      %v403 = vpop.permute.xlu0 %402
      %404 = vrot.lane.b32.xlu0 %v215, 127
      %v405 = vpop.permute.xlu0 %404
      %406 = vrot.lane.b32.xlu0 %v218, 127
      %v407 = vpop.permute.xlu0 %406
      %408 = vrot.lane.b32.xlu0 %v210, 127
      %v409 = vpop.permute.xlu0 %408
      %410 = vrot.lane.b32.xlu0 %v213, 127
      %v411 = vpop.permute.xlu0 %410
      %412 = vrot.lane.b32.xlu0 %v216, 127
      %v413 = vpop.permute.xlu0 %412
      %414 = vrot.lane.b32.xlu0 %v219, 127
      %v415 = vpop.permute.xlu0 %414
      %vm416 = vcmp.lt.s32.totalorder %v245, 127
      %v417 = vsel %vm416, %v401, %v409
      %v418 = vsel %vm416, %v403, %v411
      %v419 = vsel %vm416, %v405, %v413
      %v420 = vsel %vm416, %v407, %v415
      %v421 = vsel %vm416, %v393, %v401
      %v422 = vsel %vm416, %v395, %v403
      %v423 = vsel %vm416, %v397, %v405
      %v424 = vsel %vm416, %v399, %v407
      %v425 = vsel %vm416, %v409, %v393
      %v426 = vsel %vm416, %v411, %v395
      %v427 = vsel %vm416, %v413, %v397
      %v428 = vsel %vm416, %v415, %v399
      %s429 = scalar_lea.vmem %s1, 16
      %v430 = vld [vmem:[%s429] sm:$0xf]
      %v431 = vld [vmem:[%s429 + $0x4] sm:$0xf]
      %v432 = vld [vmem:[%s429 + $0x8] sm:$0xf]
      %v433 = vld [vmem:[%s429 + $0xc] sm:$0xf]
      %v434 = vpack.c.bf16 %v389, %v388
      %v435 = vpack.c.bf16 %v385, %v384
      %v436 = vpack.c.bf16 %v381, %v380
      %v437 = vpack.c.bf16 %v391, %v390
      %v438 = vpack.c.bf16 %v387, %v386
      %v439 = vpack.c.bf16 %v383, %v382
      %v440 = vpack.c.bf16 %v211, %v208
      %v441 = vpack.c.bf16 %v212, %v209
      %v442 = vpack.c.bf16 %v213, %v210
      %v443 = vpack.c.bf16 %v217, %v214
      %v444 = vpack.c.bf16 %v218, %v215
      %v445 = vpack.c.bf16 %v219, %v216
      %v446 = vpack.c.bf16 %v422, %v421
      %v447 = vpack.c.bf16 %v418, %v417
      %v448 = vpack.c.bf16 %v426, %v425
      %v449 = vpack.c.bf16 %v424, %v423
      %v450 = vpack.c.bf16 %v420, %v419
      %v451 = vpack.c.bf16 %v428, %v427
      %v456 = vunpack.c.l.b16 %v430
      %v457 = vunpack.c.l.b16 %v431
      %v458 = vunpack.c.l.b16 %v432
      %v459 = vunpack.c.l.b16 %v433
      %v460 = vpack.c.b16 %v457, %v456
      %v461 = vpack.c.b16 %v459, %v458
      %vm462 = vcmask 785408
      %v464 = vsel %vm462, %v460, 0
      %v467 = vsel %vm462, %v461, 0
      %469 = vmatprep.subr.bf16.mxu0 %v435
      %470 = vmatpush1.bf16.msra.mxu0 %v434
      %471 = vmatprep.subr.bf16.mxu0 %v438
      %472 = vmatpush1.bf16.msra.mxu0 %v437
      %473 = vmatprep.subr.bf16.mxu0 %v441
      %474 = vmatpush1.bf16.msra.mxu0 %v440
      %475 = vmatprep.subr.bf16.mxu0 %v444
      %476 = vmatpush1.bf16.msra.mxu0 %v443
      %477 = vmatprep.subr.bf16.mxu0 %v447
      %478 = vmatpush1.bf16.msra.mxu0 %v446
      %479 = vmatprep.subr.bf16.mxu0 %v450
      %480 = vmatpush1.bf16.msra.mxu0 %v449
      %481 = vmatprep.subr.bf16.mxu0 0
      %482 = vmatpush1.bf16.msra.mxu0 0
      %483 = vmatprep.subr.bf16.mxu0 0
      %484 = vmatpush1.bf16.msra.mxu0 0
      %485 = vmatprep.subr.bf16.mxu0 0
      %486 = vmatpush1.bf16.msra.mxu0 0
      %487 = vmatprep.subr.bf16.mxu0 0
      %488 = vmatpush1.bf16.msra.mxu0 0
      %489 = vmatprep.subr.bf16.mxu0 0
      %490 = vmatpush1.bf16.msra.mxu0 0
      %491 = vmatprep.subr.bf16.mxu0 0
      %492 = vmatpush1.bf16.msra.mxu0 0
      %493 = vmatprep.subr.bf16.mxu0 0
      %494 = vmatpush1.bf16.msra.mxu0 0
      %495 = vmatprep.subr.bf16.mxu0 0
      %496 = vmatpush1.bf16.msra.mxu0 0
      %497 = vmatprep.subr.bf16.mxu0 0
      %498 = vmatpush1.bf16.msra.mxu0 0
      %499 = vmatprep.subr.bf16.mxu0 0
      %500 = vmatpush1.bf16.msra.mxu0 0
      %501 = vmatprep.mubr.bf16.mxu0 0
      %502 = vmatmul.mubr.bf16.gmra.mrb[0].mxu0 %v464
      %v503 = vpop.f32.mrb[0].mxu0
      %v504 = vadd.f32 0.0, %v503
      %v505 = vpop.f32.mrb[0].mxu0
      %v506 = vadd.f32 0.0, %v505
      %v507 = vpop.f32.mrb[0].mxu0
      %v508 = vadd.f32 0.0, %v507
      %v509 = vpop.f32.mrb[0].mxu0
      %v510 = vadd.f32 0.0, %v509
      %511 = vmatprep.mubr.bf16.mxu0 0
      %512 = vmatmul.mubr.bf16.gmra.mrb[0].mxu0 %v467
      %v513 = vpop.f32.mrb[0].mxu0
      %v514 = vadd.f32 0.0, %v513
      %v515 = vpop.f32.mrb[0].mxu0
      %v516 = vadd.f32 0.0, %v515
      %v517 = vpop.f32.mrb[0].mxu0
      %v518 = vadd.f32 0.0, %v517
      %v519 = vpop.f32.mrb[0].mxu0
      %v520 = vadd.f32 0.0, %v519
      %521 = vdwg.mxu0
      %522 = vmatprep.subr.bf16.mxu0 0
      %523 = vmatpush1.bf16.msra.mxu0 %v436
      %524 = vmatprep.subr.bf16.mxu0 0
      %525 = vmatpush1.bf16.msra.mxu0 %v439
      %526 = vmatprep.subr.bf16.mxu0 0
      %527 = vmatpush1.bf16.msra.mxu0 %v442
      %528 = vmatprep.subr.bf16.mxu0 0
      %529 = vmatpush1.bf16.msra.mxu0 %v445
      %530 = vmatprep.subr.bf16.mxu0 0
      %531 = vmatpush1.bf16.msra.mxu0 %v448
      %532 = vmatprep.subr.bf16.mxu0 0
      %533 = vmatpush1.bf16.msra.mxu0 %v451
      %534 = vmatprep.subr.bf16.mxu0 0
      %535 = vmatpush1.bf16.msra.mxu0 0
      %536 = vmatprep.subr.bf16.mxu0 0
      %537 = vmatpush1.bf16.msra.mxu0 0
      %538 = vmatprep.subr.bf16.mxu0 0
      %539 = vmatpush1.bf16.msra.mxu0 0
      %540 = vmatprep.subr.bf16.mxu0 0
      %541 = vmatpush1.bf16.msra.mxu0 0
      %542 = vmatprep.subr.bf16.mxu0 0
      %543 = vmatpush1.bf16.msra.mxu0 0
      %544 = vmatprep.subr.bf16.mxu0 0
      %545 = vmatpush1.bf16.msra.mxu0 0
      %546 = vmatprep.subr.bf16.mxu0 0
      %547 = vmatpush1.bf16.msra.mxu0 0
      %548 = vmatprep.subr.bf16.mxu0 0
      %549 = vmatpush1.bf16.msra.mxu0 0
      %550 = vmatprep.subr.bf16.mxu0 0
      %551 = vmatpush1.bf16.msra.mxu0 0
      %552 = vmatprep.subr.bf16.mxu0 0
      %553 = vmatpush1.bf16.msra.mxu0 0
      %554 = vmatprep.mubr.bf16.mxu0 0
      %555 = vmatmul.mubr.bf16.gmra.mrb[0].mxu0 %v464
      %v556 = vpop.f32.mrb[0].mxu0
      %v557 = vadd.f32 0.0, %v556
      %v558 = vpop.f32.mrb[0].mxu0
      %v559 = vpop.f32.mrb[0].mxu0
      %v560 = vadd.f32 0.0, %v559
      %v561 = vpop.f32.mrb[0].mxu0
      %562 = vmatprep.mubr.bf16.mxu0 0
      %563 = vmatmul.mubr.bf16.gmra.mrb[0].mxu0 %v467
      %v564 = vpop.f32.mrb[0].mxu0
      %v565 = vadd.f32 0.0, %v564
      %v566 = vpop.f32.mrb[0].mxu0
      %v567 = vpop.f32.mrb[0].mxu0
      %v568 = vadd.f32 0.0, %v567
      %v569 = vpop.f32.mrb[0].mxu0
      %570 = vdwg.mxu0
      %v575 = vunpack.c.l.b16 %v333
      %v576 = vunpack.c.l.b16 %v334
      %v577 = vunpack.c.l.b16 %v335
      %v578 = vunpack.c.l.b16 %v336
      %v579 = vpack.c.b16 %v576, %v575
      %v580 = vpack.c.b16 %v578, %v577
      %v582 = vsel %vm462, %v579, 0
      %v585 = vsel %vm462, %v580, 0
      %587 = vmatprep.subr.bf16.mxu0 %v338
      %588 = vmatpush1.bf16.msra.mxu0 %v337
      %589 = vmatprep.subr.bf16.mxu0 %v341
      %590 = vmatpush1.bf16.msra.mxu0 %v340
      %591 = vmatprep.subr.bf16.mxu0 %v344
      %592 = vmatpush1.bf16.msra.mxu0 %v343
      %593 = vmatprep.subr.bf16.mxu0 %v347
      %594 = vmatpush1.bf16.msra.mxu0 %v346
      %595 = vmatprep.subr.bf16.mxu0 %v350
      %596 = vmatpush1.bf16.msra.mxu0 %v349
      %597 = vmatprep.subr.bf16.mxu0 %v353
      %598 = vmatpush1.bf16.msra.mxu0 %v352
      %599 = vmatprep.subr.bf16.mxu0 0
      %600 = vmatpush1.bf16.msra.mxu0 0
      %601 = vmatprep.subr.bf16.mxu0 0
      %602 = vmatpush1.bf16.msra.mxu0 0
      %603 = vmatprep.subr.bf16.mxu0 0
      %604 = vmatpush1.bf16.msra.mxu0 0
      %605 = vmatprep.subr.bf16.mxu0 0
      %606 = vmatpush1.bf16.msra.mxu0 0
      %607 = vmatprep.subr.bf16.mxu0 0
      %608 = vmatpush1.bf16.msra.mxu0 0
      %609 = vmatprep.subr.bf16.mxu0 0
      %610 = vmatpush1.bf16.msra.mxu0 0
      %611 = vmatprep.subr.bf16.mxu0 0
      %612 = vmatpush1.bf16.msra.mxu0 0
      %613 = vmatprep.subr.bf16.mxu0 0
      %614 = vmatpush1.bf16.msra.mxu0 0
      %615 = vmatprep.subr.bf16.mxu0 0
      %616 = vmatpush1.bf16.msra.mxu0 0
      %617 = vmatprep.subr.bf16.mxu0 0
      %618 = vmatpush1.bf16.msra.mxu0 0
      %619 = vmatprep.mubr.bf16.mxu0 0
      %620 = vmatmul.mubr.bf16.gmra.mrb[0].mxu0 %v582
      %v621 = vpop.f32.mrb[0].mxu0
      %v622 = vadd.f32 %v504, %v621
      %v623 = vpop.f32.mrb[0].mxu0
      %v624 = vadd.f32 %v506, %v623
      %v625 = vpop.f32.mrb[0].mxu0
      %v626 = vadd.f32 %v508, %v625
      %v627 = vpop.f32.mrb[0].mxu0
      %v628 = vadd.f32 %v510, %v627
      %629 = vmatprep.mubr.bf16.mxu0 0
      %630 = vmatmul.mubr.bf16.gmra.mrb[0].mxu0 %v585
      %v631 = vpop.f32.mrb[0].mxu0
      %v632 = vadd.f32 %v514, %v631
      %v633 = vpop.f32.mrb[0].mxu0
      %v634 = vadd.f32 %v516, %v633
      %v635 = vpop.f32.mrb[0].mxu0
      %v636 = vadd.f32 %v518, %v635
      %v637 = vpop.f32.mrb[0].mxu0
      %v638 = vadd.f32 %v520, %v637
      %639 = vdwg.mxu0
      %640 = vmatprep.subr.bf16.mxu0 0
      %641 = vmatpush1.bf16.msra.mxu0 %v339
      %642 = vmatprep.subr.bf16.mxu0 0
      %643 = vmatpush1.bf16.msra.mxu0 %v342
      %644 = vmatprep.subr.bf16.mxu0 0
      %645 = vmatpush1.bf16.msra.mxu0 %v345
      %646 = vmatprep.subr.bf16.mxu0 0
      %647 = vmatpush1.bf16.msra.mxu0 %v348
      %648 = vmatprep.subr.bf16.mxu0 0
      %649 = vmatpush1.bf16.msra.mxu0 %v351
      %650 = vmatprep.subr.bf16.mxu0 0
      %651 = vmatpush1.bf16.msra.mxu0 %v354
      %652 = vmatprep.subr.bf16.mxu0 0
      %653 = vmatpush1.bf16.msra.mxu0 0
      %654 = vmatprep.subr.bf16.mxu0 0
      %655 = vmatpush1.bf16.msra.mxu0 0
      %656 = vmatprep.subr.bf16.mxu0 0
      %657 = vmatpush1.bf16.msra.mxu0 0
      %658 = vmatprep.subr.bf16.mxu0 0
      %659 = vmatpush1.bf16.msra.mxu0 0
      %660 = vmatprep.subr.bf16.mxu0 0
      %661 = vmatpush1.bf16.msra.mxu0 0
      %662 = vmatprep.subr.bf16.mxu0 0
      %663 = vmatpush1.bf16.msra.mxu0 0
      %664 = vmatprep.subr.bf16.mxu0 0
      %665 = vmatpush1.bf16.msra.mxu0 0
      %666 = vmatprep.subr.bf16.mxu0 0
      %667 = vmatpush1.bf16.msra.mxu0 0
      %668 = vmatprep.subr.bf16.mxu0 0
      %669 = vmatpush1.bf16.msra.mxu0 0
      %670 = vmatprep.subr.bf16.mxu0 0
      %671 = vmatpush1.bf16.msra.mxu0 0
      %672 = vmatprep.mubr.bf16.mxu0 0
      %673 = vmatmul.mubr.bf16.gmra.mrb[0].mxu0 %v582
      %v674 = vpop.f32.mrb[0].mxu0
      %v675 = vadd.f32 %v557, %v674
      %v676 = vpop.f32.mrb[0].mxu0
      %v677 = vpop.f32.mrb[0].mxu0
      %v678 = vadd.f32 %v560, %v677
      %v679 = vpop.f32.mrb[0].mxu0
      %680 = vmatprep.mubr.bf16.mxu0 0
      %681 = vmatmul.mubr.bf16.gmra.mrb[0].mxu0 %v585
      %v682 = vpop.f32.mrb[0].mxu0
      %v683 = vadd.f32 %v565, %v682
      %v684 = vpop.f32.mrb[0].mxu0
      %v685 = vpop.f32.mrb[0].mxu0
      %v686 = vadd.f32 %v568, %v685
      %v687 = vpop.f32.mrb[0].mxu0
      %688 = vdwg.mxu0
      %689 = vrot.lane.b32.xlu0 %v208, 111
      %v690 = vpop.permute.xlu0 %689
      %691 = vrot.lane.b32.xlu0 %v211, 111
      %v692 = vpop.permute.xlu0 %691
      %693 = vrot.lane.b32.xlu0 %v214, 111
      %v694 = vpop.permute.xlu0 %693
      %695 = vrot.lane.b32.xlu0 %v217, 111
      %v696 = vpop.permute.xlu0 %695
      %697 = vrot.lane.b32.xlu0 %v209, 111
      %v698 = vpop.permute.xlu0 %697
      %699 = vrot.lane.b32.xlu0 %v212, 111
      %v700 = vpop.permute.xlu0 %699
      %701 = vrot.lane.b32.xlu0 %v215, 111
      %v702 = vpop.permute.xlu0 %701
      %703 = vrot.lane.b32.xlu0 %v218, 111
      %v704 = vpop.permute.xlu0 %703
      %705 = vrot.lane.b32.xlu0 %v210, 111
      %v706 = vpop.permute.xlu0 %705
      %707 = vrot.lane.b32.xlu0 %v213, 111
      %v708 = vpop.permute.xlu0 %707
      %709 = vrot.lane.b32.xlu0 %v216, 111
      %v710 = vpop.permute.xlu0 %709
      %711 = vrot.lane.b32.xlu0 %v219, 111
      %v712 = vpop.permute.xlu0 %711
      %vm713 = vcmp.lt.s32.totalorder %v245, 111
      %v714 = vsel %vm713, %v698, %v706
      %v715 = vsel %vm713, %v700, %v708
      %v716 = vsel %vm713, %v702, %v710
      %v717 = vsel %vm713, %v704, %v712
      %v718 = vsel %vm713, %v690, %v698
      %v719 = vsel %vm713, %v692, %v700
      %v720 = vsel %vm713, %v694, %v702
      %v721 = vsel %vm713, %v696, %v704
      %v722 = vsel %vm713, %v706, %v690
      %v723 = vsel %vm713, %v708, %v692
      %v724 = vsel %vm713, %v710, %v694
      %v725 = vsel %vm713, %v712, %v696
      %726 = vrot.lane.b32.xlu0 %v208, 110
      %v727 = vpop.permute.xlu0 %726
      %728 = vrot.lane.b32.xlu0 %v211, 110
      %v729 = vpop.permute.xlu0 %728
      %730 = vrot.lane.b32.xlu0 %v214, 110
      %v731 = vpop.permute.xlu0 %730
      %732 = vrot.lane.b32.xlu0 %v217, 110
      %v733 = vpop.permute.xlu0 %732
      %734 = vrot.lane.b32.xlu0 %v209, 110
      %v735 = vpop.permute.xlu0 %734
      %736 = vrot.lane.b32.xlu0 %v212, 110
      %v737 = vpop.permute.xlu0 %736
      %738 = vrot.lane.b32.xlu0 %v215, 110
      %v739 = vpop.permute.xlu0 %738
      %740 = vrot.lane.b32.xlu0 %v218, 110
      %v741 = vpop.permute.xlu0 %740
      %742 = vrot.lane.b32.xlu0 %v210, 110
      %v743 = vpop.permute.xlu0 %742
      %744 = vrot.lane.b32.xlu0 %v213, 110
      %v745 = vpop.permute.xlu0 %744
      %746 = vrot.lane.b32.xlu0 %v216, 110
      %v747 = vpop.permute.xlu0 %746
      %748 = vrot.lane.b32.xlu0 %v219, 110
      %v749 = vpop.permute.xlu0 %748
      %vm750 = vcmp.lt.s32.totalorder %v245, 110
      %v751 = vsel %vm750, %v735, %v743
      %v752 = vsel %vm750, %v737, %v745
      %v753 = vsel %vm750, %v739, %v747
      %v754 = vsel %vm750, %v741, %v749
      %v755 = vsel %vm750, %v727, %v735
      %v756 = vsel %vm750, %v729, %v737
      %v757 = vsel %vm750, %v731, %v739
      %v758 = vsel %vm750, %v733, %v741
      %v759 = vsel %vm750, %v743, %v727
      %v760 = vsel %vm750, %v745, %v729
      %v761 = vsel %vm750, %v747, %v731
      %v762 = vsel %vm750, %v749, %v733
      %763 = vrot.lane.b32.xlu0 %v208, 109
      %v764 = vpop.permute.xlu0 %763
      %765 = vrot.lane.b32.xlu0 %v211, 109
      %v766 = vpop.permute.xlu0 %765
      %767 = vrot.lane.b32.xlu0 %v214, 109
      %v768 = vpop.permute.xlu0 %767
      %769 = vrot.lane.b32.xlu0 %v217, 109
      %v770 = vpop.permute.xlu0 %769
      %771 = vrot.lane.b32.xlu0 %v209, 109
      %v772 = vpop.permute.xlu0 %771
      %773 = vrot.lane.b32.xlu0 %v212, 109
      %v774 = vpop.permute.xlu0 %773
      %775 = vrot.lane.b32.xlu0 %v215, 109
      %v776 = vpop.permute.xlu0 %775
      %777 = vrot.lane.b32.xlu0 %v218, 109
      %v778 = vpop.permute.xlu0 %777
      %779 = vrot.lane.b32.xlu0 %v210, 109
      %v780 = vpop.permute.xlu0 %779
      %781 = vrot.lane.b32.xlu0 %v213, 109
      %v782 = vpop.permute.xlu0 %781
      %783 = vrot.lane.b32.xlu0 %v216, 109
      %v784 = vpop.permute.xlu0 %783
      %785 = vrot.lane.b32.xlu0 %v219, 109
      %v786 = vpop.permute.xlu0 %785
      %vm787 = vcmp.lt.s32.totalorder %v245, 109
      %v788 = vsel %vm787, %v772, %v780
      %v789 = vsel %vm787, %v774, %v782
      %v790 = vsel %vm787, %v776, %v784
      %v791 = vsel %vm787, %v778, %v786
      %v792 = vsel %vm787, %v764, %v772
      %v793 = vsel %vm787, %v766, %v774
      %v794 = vsel %vm787, %v768, %v776
      %v795 = vsel %vm787, %v770, %v778
      %v796 = vsel %vm787, %v780, %v764
      %v797 = vsel %vm787, %v782, %v766
      %v798 = vsel %vm787, %v784, %v768
      %v799 = vsel %vm787, %v786, %v770
      %s800 = scalar_lea.vmem %s1, 32
      %v801 = vld [vmem:[%s800] sm:$0xf]
      %v802 = vld [vmem:[%s800 + $0x4] sm:$0xf]
      %v803 = vld [vmem:[%s800 + $0x8] sm:$0xf]
      %v804 = vld [vmem:[%s800 + $0xc] sm:$0xf]
      %v805 = vpack.c.bf16 %v719, %v718
      %v806 = vpack.c.bf16 %v715, %v714
      %v807 = vpack.c.bf16 %v723, %v722
      %v808 = vpack.c.bf16 %v721, %v720
      %v809 = vpack.c.bf16 %v717, %v716
      %v810 = vpack.c.bf16 %v725, %v724
      %v811 = vpack.c.bf16 %v756, %v755
      %v812 = vpack.c.bf16 %v752, %v751
      %v813 = vpack.c.bf16 %v760, %v759
      %v814 = vpack.c.bf16 %v758, %v757
      %v815 = vpack.c.bf16 %v754, %v753
      %v816 = vpack.c.bf16 %v762, %v761
      %v817 = vpack.c.bf16 %v793, %v792
      %v818 = vpack.c.bf16 %v789, %v788
      %v819 = vpack.c.bf16 %v797, %v796
      %v820 = vpack.c.bf16 %v795, %v794
      %v821 = vpack.c.bf16 %v791, %v790
      %v822 = vpack.c.bf16 %v799, %v798
      %v827 = vunpack.c.l.b16 %v801
      %v828 = vunpack.c.l.b16 %v802
      %v829 = vunpack.c.l.b16 %v803
      %v830 = vunpack.c.l.b16 %v804
      %v831 = vpack.c.b16 %v828, %v827
      %v832 = vpack.c.b16 %v830, %v829
      %v834 = vsel %vm462, %v831, 0
      %v837 = vsel %vm462, %v832, 0
      %839 = vmatprep.subr.bf16.mxu0 %v806
      %840 = vmatpush1.bf16.msra.mxu0 %v805
      %841 = vmatprep.subr.bf16.mxu0 %v809
      %842 = vmatpush1.bf16.msra.mxu0 %v808
      %843 = vmatprep.subr.bf16.mxu0 %v812
      %844 = vmatpush1.bf16.msra.mxu0 %v811
      %845 = vmatprep.subr.bf16.mxu0 %v815
      %846 = vmatpush1.bf16.msra.mxu0 %v814
      %847 = vmatprep.subr.bf16.mxu0 %v818
      %848 = vmatpush1.bf16.msra.mxu0 %v817
      %849 = vmatprep.subr.bf16.mxu0 %v821
      %850 = vmatpush1.bf16.msra.mxu0 %v820
      %851 = vmatprep.subr.bf16.mxu0 0
      %852 = vmatpush1.bf16.msra.mxu0 0
      %853 = vmatprep.subr.bf16.mxu0 0
      %854 = vmatpush1.bf16.msra.mxu0 0
      %855 = vmatprep.subr.bf16.mxu0 0
      %856 = vmatpush1.bf16.msra.mxu0 0
      %857 = vmatprep.subr.bf16.mxu0 0
      %858 = vmatpush1.bf16.msra.mxu0 0
      %859 = vmatprep.subr.bf16.mxu0 0
      %860 = vmatpush1.bf16.msra.mxu0 0
      %861 = vmatprep.subr.bf16.mxu0 0
      %862 = vmatpush1.bf16.msra.mxu0 0
      %863 = vmatprep.subr.bf16.mxu0 0
      %864 = vmatpush1.bf16.msra.mxu0 0
      %865 = vmatprep.subr.bf16.mxu0 0
      %866 = vmatpush1.bf16.msra.mxu0 0
      %867 = vmatprep.subr.bf16.mxu0 0
      %868 = vmatpush1.bf16.msra.mxu0 0
      %869 = vmatprep.subr.bf16.mxu0 0
      %870 = vmatpush1.bf16.msra.mxu0 0
      %871 = vmatprep.mubr.bf16.mxu0 0
      %872 = vmatmul.mubr.bf16.gmra.mrb[0].mxu0 %v834
      %v873 = vpop.f32.mrb[0].mxu0
      %v874 = vadd.f32 0.0, %v873
      %v875 = vpop.f32.mrb[0].mxu0
      %v876 = vadd.f32 0.0, %v875
      %v877 = vpop.f32.mrb[0].mxu0
      %v878 = vadd.f32 0.0, %v877
      %v879 = vpop.f32.mrb[0].mxu0
      %v880 = vadd.f32 0.0, %v879
      %881 = vmatprep.mubr.bf16.mxu0 0
      %882 = vmatmul.mubr.bf16.gmra.mrb[0].mxu0 %v837
      %v883 = vpop.f32.mrb[0].mxu0
      %v884 = vadd.f32 0.0, %v883
      %v885 = vpop.f32.mrb[0].mxu0
      %v886 = vadd.f32 0.0, %v885
      %v887 = vpop.f32.mrb[0].mxu0
      %v888 = vadd.f32 0.0, %v887
      %v889 = vpop.f32.mrb[0].mxu0
      %v890 = vadd.f32 0.0, %v889
      %891 = vdwg.mxu0
      %892 = vmatprep.subr.bf16.mxu0 0
      %893 = vmatpush1.bf16.msra.mxu0 %v807
      %894 = vmatprep.subr.bf16.mxu0 0
      %895 = vmatpush1.bf16.msra.mxu0 %v810
      %896 = vmatprep.subr.bf16.mxu0 0
      %897 = vmatpush1.bf16.msra.mxu0 %v813
      %898 = vmatprep.subr.bf16.mxu0 0
      %899 = vmatpush1.bf16.msra.mxu0 %v816
      %900 = vmatprep.subr.bf16.mxu0 0
      %901 = vmatpush1.bf16.msra.mxu0 %v819
      %902 = vmatprep.subr.bf16.mxu0 0
      %903 = vmatpush1.bf16.msra.mxu0 %v822
      %904 = vmatprep.subr.bf16.mxu0 0
      %905 = vmatpush1.bf16.msra.mxu0 0
      %906 = vmatprep.subr.bf16.mxu0 0
      %907 = vmatpush1.bf16.msra.mxu0 0
      %908 = vmatprep.subr.bf16.mxu0 0
      %909 = vmatpush1.bf16.msra.mxu0 0
      %910 = vmatprep.subr.bf16.mxu0 0
      %911 = vmatpush1.bf16.msra.mxu0 0
      %912 = vmatprep.subr.bf16.mxu0 0
      %913 = vmatpush1.bf16.msra.mxu0 0
      %914 = vmatprep.subr.bf16.mxu0 0
      %915 = vmatpush1.bf16.msra.mxu0 0
      %916 = vmatprep.subr.bf16.mxu0 0
      %917 = vmatpush1.bf16.msra.mxu0 0
      %918 = vmatprep.subr.bf16.mxu0 0
      %919 = vmatpush1.bf16.msra.mxu0 0
      %920 = vmatprep.subr.bf16.mxu0 0
      %921 = vmatpush1.bf16.msra.mxu0 0
      %922 = vmatprep.subr.bf16.mxu0 0
      %923 = vmatpush1.bf16.msra.mxu0 0
      %924 = vmatprep.mubr.bf16.mxu0 0
      %925 = vmatmul.mubr.bf16.gmra.mrb[0].mxu0 %v834
      %v926 = vpop.f32.mrb[0].mxu0
      %v927 = vadd.f32 0.0, %v926
      %v928 = vpop.f32.mrb[0].mxu0
      %v929 = vpop.f32.mrb[0].mxu0
      %v930 = vadd.f32 0.0, %v929
      %v931 = vpop.f32.mrb[0].mxu0
      %932 = vmatprep.mubr.bf16.mxu0 0
      %933 = vmatmul.mubr.bf16.gmra.mrb[0].mxu0 %v837
      %v934 = vpop.f32.mrb[0].mxu0
      %v935 = vadd.f32 0.0, %v934
      %v936 = vpop.f32.mrb[0].mxu0
      %v937 = vpop.f32.mrb[0].mxu0
      %v938 = vadd.f32 0.0, %v937
      %v939 = vpop.f32.mrb[0].mxu0
      %940 = vdwg.mxu0
      %v941 = vadd.f32 %v622, %v874
      %v942 = vadd.f32 %v624, %v876
      %v943 = vadd.f32 %v675, %v927
      %v944 = vadd.f32 %v626, %v878
      %v945 = vadd.f32 %v628, %v880
      %v946 = vadd.f32 %v678, %v930
      %v947 = vadd.f32 %v632, %v884
      %v948 = vadd.f32 %v634, %v886
      %v949 = vadd.f32 %v683, %v935
      %v950 = vadd.f32 %v636, %v888
      %v951 = vadd.f32 %v638, %v890
      %v952 = vadd.f32 %v686, %v938
      %v953 = vld [vmem:[%s2] sm:$0xff]
      %v954 = vld [vmem:[%s2 + $0x8] sm:$0xff]
      %v955 = vld [vmem:[%s2 + $0x10] sm:$0xff]
      %v956 = vld [vmem:[%s2 + $0x18] sm:$0xff]
      %958 = vset.pattern.permute.xlu0 0
      %959 = vperm.xlu0 %958, %v953
      %v960 = vpop.permute.xlu0 %959
      %963 = vset.pattern.permute.xlu0 0
      %964 = vperm.xlu0 %963, %v954
      %v965 = vpop.permute.xlu0 %964
      %968 = vset.pattern.permute.xlu0 0
      %969 = vperm.xlu0 %968, %v955
      %v970 = vpop.permute.xlu0 %969
      %973 = vset.pattern.permute.xlu0 0
      %974 = vperm.xlu0 %973, %v956
      %v975 = vpop.permute.xlu0 %974
      %v977 = vadd.f32 %v941, %v960
      %v978 = vadd.f32 %v942, %v960
      %v979 = vadd.f32 %v943, %v960
      %v980 = vadd.f32 %v944, %v965
      %v981 = vadd.f32 %v945, %v965
      %v982 = vadd.f32 %v946, %v965
      %v983 = vadd.f32 %v947, %v970
      %v984 = vadd.f32 %v948, %v970
      %v985 = vadd.f32 %v949, %v970
      %v986 = vadd.f32 %v950, %v975
      %v987 = vadd.f32 %v951, %v975
      %v988 = vadd.f32 %v952, %v975
      %v989 = vmax.f32 %v977, 0.0
      %v990 = vmax.f32 %v978, 0.0
      %v991 = vmax.f32 %v979, 0.0
      %v992 = vmax.f32 %v980, 0.0
      %v993 = vmax.f32 %v981, 0.0
      %v994 = vmax.f32 %v982, 0.0
      %v995 = vmax.f32 %v983, 0.0
      %v996 = vmax.f32 %v984, 0.0
      %v997 = vmax.f32 %v985, 0.0
      %v998 = vmax.f32 %v986, 0.0
      %v999 = vmax.f32 %v987, 0.0
      %v1000 = vmax.f32 %v988, 0.0
      %v1002 = vlaneseq
      %v1003 = vshrl.u32 %v1002, 7
      %v1004 = vsub.s32 0, %v1003
      %v1005 = vrot.slane %v199, %v1004
      %v1006 = vlaneseq
      %v1007 = vshrl.u32 %v1006, 7
      %v1008 = vsub.s32 1, %v1007
      %v1009 = vrot.slane %v199, %v1008
      %v1010 = vlaneseq
      %v1011 = vshrl.u32 %v1010, 7
      %v1012 = vsub.s32 2, %v1011
      %v1013 = vrot.slane %v199, %v1012
      %v1017 = vmul.f32 %v989, %v1005
      %v1018 = vmul.f32 %v990, %v1009
      %v1019 = vmul.f32 %v991, %v1013
      %v1020 = vmul.f32 %v992, %v1005
      %v1021 = vmul.f32 %v993, %v1009
      %v1022 = vmul.f32 %v994, %v1013
      %v1023 = vmul.f32 %v995, %v1005
      %v1024 = vmul.f32 %v996, %v1009
      %v1025 = vmul.f32 %v997, %v1013
      %v1026 = vmul.f32 %v998, %v1005
      %v1027 = vmul.f32 %v999, %v1009
      %v1028 = vmul.f32 %v1000, %v1013
      %1029 = vrot.lane.b32.xlu0 %v1017, 19
      %v1030 = vpop.permute.xlu0 %1029
      %1031 = vrot.lane.b32.xlu0 %v1020, 19
      %v1032 = vpop.permute.xlu0 %1031
      %1033 = vrot.lane.b32.xlu0 %v1023, 19
      %v1034 = vpop.permute.xlu0 %1033
      %1035 = vrot.lane.b32.xlu0 %v1026, 19
      %v1036 = vpop.permute.xlu0 %1035
      %1037 = vrot.lane.b32.xlu0 %v1018, 19
      %v1038 = vpop.permute.xlu0 %1037
      %1039 = vrot.lane.b32.xlu0 %v1021, 19
      %v1040 = vpop.permute.xlu0 %1039
      %1041 = vrot.lane.b32.xlu0 %v1024, 19
      %v1042 = vpop.permute.xlu0 %1041
      %1043 = vrot.lane.b32.xlu0 %v1027, 19
      %v1044 = vpop.permute.xlu0 %1043
      %1045 = vrot.lane.b32.xlu0 %v1019, 19
      %v1046 = vpop.permute.xlu0 %1045
      %1047 = vrot.lane.b32.xlu0 %v1022, 19
      %v1048 = vpop.permute.xlu0 %1047
      %1049 = vrot.lane.b32.xlu0 %v1025, 19
      %v1050 = vpop.permute.xlu0 %1049
      %1051 = vrot.lane.b32.xlu0 %v1028, 19
      %v1052 = vpop.permute.xlu0 %1051
      %v1053 = vsel %vm246, %v1038, %v1046
      %v1054 = vsel %vm246, %v1040, %v1048
      %v1055 = vsel %vm246, %v1042, %v1050
      %v1056 = vsel %vm246, %v1044, %v1052
      %v1057 = vsel %vm246, %v1030, %v1038
      %v1058 = vsel %vm246, %v1032, %v1040
      %v1059 = vsel %vm246, %v1034, %v1042
      %v1060 = vsel %vm246, %v1036, %v1044
      %v1061 = vsel %vm246, %v1046, %v1030
      %v1062 = vsel %vm246, %v1048, %v1032
      %v1063 = vsel %vm246, %v1050, %v1034
      %v1064 = vsel %vm246, %v1052, %v1036
      %1065 = vrot.lane.b32.xlu0 %v1017, 18
      %v1066 = vpop.permute.xlu0 %1065
      %1067 = vrot.lane.b32.xlu0 %v1020, 18
      %v1068 = vpop.permute.xlu0 %1067
      %1069 = vrot.lane.b32.xlu0 %v1023, 18
      %v1070 = vpop.permute.xlu0 %1069
      %1071 = vrot.lane.b32.xlu0 %v1026, 18
      %v1072 = vpop.permute.xlu0 %1071
      %1073 = vrot.lane.b32.xlu0 %v1018, 18
      %v1074 = vpop.permute.xlu0 %1073
      %1075 = vrot.lane.b32.xlu0 %v1021, 18
      %v1076 = vpop.permute.xlu0 %1075
      %1077 = vrot.lane.b32.xlu0 %v1024, 18
      %v1078 = vpop.permute.xlu0 %1077
      %1079 = vrot.lane.b32.xlu0 %v1027, 18
      %v1080 = vpop.permute.xlu0 %1079
      %1081 = vrot.lane.b32.xlu0 %v1019, 18
      %v1082 = vpop.permute.xlu0 %1081
      %1083 = vrot.lane.b32.xlu0 %v1022, 18
      %v1084 = vpop.permute.xlu0 %1083
      %1085 = vrot.lane.b32.xlu0 %v1025, 18
      %v1086 = vpop.permute.xlu0 %1085
      %1087 = vrot.lane.b32.xlu0 %v1028, 18
      %v1088 = vpop.permute.xlu0 %1087
      %v1089 = vsel %vm283, %v1074, %v1082
      %v1090 = vsel %vm283, %v1076, %v1084
      %v1091 = vsel %vm283, %v1078, %v1086
      %v1092 = vsel %vm283, %v1080, %v1088
      %v1093 = vsel %vm283, %v1066, %v1074
      %v1094 = vsel %vm283, %v1068, %v1076
      %v1095 = vsel %vm283, %v1070, %v1078
      %v1096 = vsel %vm283, %v1072, %v1080
      %v1097 = vsel %vm283, %v1082, %v1066
      %v1098 = vsel %vm283, %v1084, %v1068
      %v1099 = vsel %vm283, %v1086, %v1070
      %v1100 = vsel %vm283, %v1088, %v1072
      %1101 = vrot.lane.b32.xlu0 %v1017, 17
      %v1102 = vpop.permute.xlu0 %1101
      %1103 = vrot.lane.b32.xlu0 %v1020, 17
      %v1104 = vpop.permute.xlu0 %1103
      %1105 = vrot.lane.b32.xlu0 %v1023, 17
      %v1106 = vpop.permute.xlu0 %1105
      %1107 = vrot.lane.b32.xlu0 %v1026, 17
      %v1108 = vpop.permute.xlu0 %1107
      %1109 = vrot.lane.b32.xlu0 %v1018, 17
      %v1110 = vpop.permute.xlu0 %1109
      %1111 = vrot.lane.b32.xlu0 %v1021, 17
      %v1112 = vpop.permute.xlu0 %1111
      %1113 = vrot.lane.b32.xlu0 %v1024, 17
      %v1114 = vpop.permute.xlu0 %1113
      %1115 = vrot.lane.b32.xlu0 %v1027, 17
      %v1116 = vpop.permute.xlu0 %1115
      %1117 = vrot.lane.b32.xlu0 %v1019, 17
      %v1118 = vpop.permute.xlu0 %1117
      %1119 = vrot.lane.b32.xlu0 %v1022, 17
      %v1120 = vpop.permute.xlu0 %1119
      %1121 = vrot.lane.b32.xlu0 %v1025, 17
      %v1122 = vpop.permute.xlu0 %1121
      %1123 = vrot.lane.b32.xlu0 %v1028, 17
      %v1124 = vpop.permute.xlu0 %1123
      %v1125 = vsel %vm320, %v1110, %v1118
      %v1126 = vsel %vm320, %v1112, %v1120
      %v1127 = vsel %vm320, %v1114, %v1122
      %v1128 = vsel %vm320, %v1116, %v1124
      %v1129 = vsel %vm320, %v1102, %v1110
      %v1130 = vsel %vm320, %v1104, %v1112
      %v1131 = vsel %vm320, %v1106, %v1114
      %v1132 = vsel %vm320, %v1108, %v1116
      %v1133 = vsel %vm320, %v1118, %v1102
      %v1134 = vsel %vm320, %v1120, %v1104
      %v1135 = vsel %vm320, %v1122, %v1106
      %v1136 = vsel %vm320, %v1124, %v1108
      %s1137 = scalar_lea.vmem %s1, 48
      %v1138 = vld [vmem:[%s1137] sm:$0xf]
      %v1139 = vld [vmem:[%s1137 + $0x4] sm:$0xf]
      %v1140 = vld [vmem:[%s1137 + $0x8] sm:$0xf]
      %v1141 = vld [vmem:[%s1137 + $0xc] sm:$0xf]
      %v1142 = vpack.c.bf16 %v1062, %v1061
      %v1143 = vpack.c.bf16 %v1058, %v1057
      %v1144 = vpack.c.bf16 %v1054, %v1053
      %v1145 = vpack.c.bf16 %v1064, %v1063
      %v1146 = vpack.c.bf16 %v1060, %v1059
      %v1147 = vpack.c.bf16 %v1056, %v1055
      %v1148 = vpack.c.bf16 %v1098, %v1097
      %v1149 = vpack.c.bf16 %v1094, %v1093
      %v1150 = vpack.c.bf16 %v1090, %v1089
      %v1151 = vpack.c.bf16 %v1100, %v1099
      %v1152 = vpack.c.bf16 %v1096, %v1095
      %v1153 = vpack.c.bf16 %v1092, %v1091
      %v1154 = vpack.c.bf16 %v1134, %v1133
      %v1155 = vpack.c.bf16 %v1130, %v1129
      %v1156 = vpack.c.bf16 %v1126, %v1125
      %v1157 = vpack.c.bf16 %v1136, %v1135
      %v1158 = vpack.c.bf16 %v1132, %v1131
      %v1159 = vpack.c.bf16 %v1128, %v1127
      %1160 = vrot.lane.b32.xlu0 %v1017, 1
      %v1161 = vpop.permute.xlu0 %1160
      %1162 = vrot.lane.b32.xlu0 %v1020, 1
      %v1163 = vpop.permute.xlu0 %1162
      %1164 = vrot.lane.b32.xlu0 %v1023, 1
      %v1165 = vpop.permute.xlu0 %1164
      %1166 = vrot.lane.b32.xlu0 %v1026, 1
      %v1167 = vpop.permute.xlu0 %1166
      %1168 = vrot.lane.b32.xlu0 %v1018, 1
      %v1169 = vpop.permute.xlu0 %1168
      %1170 = vrot.lane.b32.xlu0 %v1021, 1
      %v1171 = vpop.permute.xlu0 %1170
      %1172 = vrot.lane.b32.xlu0 %v1024, 1
      %v1173 = vpop.permute.xlu0 %1172
      %1174 = vrot.lane.b32.xlu0 %v1027, 1
      %v1175 = vpop.permute.xlu0 %1174
      %1176 = vrot.lane.b32.xlu0 %v1019, 1
      %v1177 = vpop.permute.xlu0 %1176
      %1178 = vrot.lane.b32.xlu0 %v1022, 1
      %v1179 = vpop.permute.xlu0 %1178
      %1180 = vrot.lane.b32.xlu0 %v1025, 1
      %v1181 = vpop.permute.xlu0 %1180
      %1182 = vrot.lane.b32.xlu0 %v1028, 1
      %v1183 = vpop.permute.xlu0 %1182
      %v1184 = vsel %vm379, %v1169, %v1177
      %v1185 = vsel %vm379, %v1171, %v1179
      %v1186 = vsel %vm379, %v1173, %v1181
      %v1187 = vsel %vm379, %v1175, %v1183
      %v1188 = vsel %vm379, %v1161, %v1169
      %v1189 = vsel %vm379, %v1163, %v1171
      %v1190 = vsel %vm379, %v1165, %v1173
      %v1191 = vsel %vm379, %v1167, %v1175
      %v1192 = vsel %vm379, %v1177, %v1161
      %v1193 = vsel %vm379, %v1179, %v1163
      %v1194 = vsel %vm379, %v1181, %v1165
      %v1195 = vsel %vm379, %v1183, %v1167
      %1196 = vrot.lane.b32.xlu0 %v1017, 127
      %v1197 = vpop.permute.xlu0 %1196
      %1198 = vrot.lane.b32.xlu0 %v1020, 127
      %v1199 = vpop.permute.xlu0 %1198
      %1200 = vrot.lane.b32.xlu0 %v1023, 127
      %v1201 = vpop.permute.xlu0 %1200
      %1202 = vrot.lane.b32.xlu0 %v1026, 127
      %v1203 = vpop.permute.xlu0 %1202
      %1204 = vrot.lane.b32.xlu0 %v1018, 127
      %v1205 = vpop.permute.xlu0 %1204
      %1206 = vrot.lane.b32.xlu0 %v1021, 127
      %v1207 = vpop.permute.xlu0 %1206
      %1208 = vrot.lane.b32.xlu0 %v1024, 127
      %v1209 = vpop.permute.xlu0 %1208
      %1210 = vrot.lane.b32.xlu0 %v1027, 127
      %v1211 = vpop.permute.xlu0 %1210
      %1212 = vrot.lane.b32.xlu0 %v1019, 127
      %v1213 = vpop.permute.xlu0 %1212
      %1214 = vrot.lane.b32.xlu0 %v1022, 127
      %v1215 = vpop.permute.xlu0 %1214
      %1216 = vrot.lane.b32.xlu0 %v1025, 127
      %v1217 = vpop.permute.xlu0 %1216
      %1218 = vrot.lane.b32.xlu0 %v1028, 127
      %v1219 = vpop.permute.xlu0 %1218
      %v1220 = vsel %vm416, %v1205, %v1213
      %v1221 = vsel %vm416, %v1207, %v1215
      %v1222 = vsel %vm416, %v1209, %v1217
      %v1223 = vsel %vm416, %v1211, %v1219
      %v1224 = vsel %vm416, %v1197, %v1205
      %v1225 = vsel %vm416, %v1199, %v1207
      %v1226 = vsel %vm416, %v1201, %v1209
      %v1227 = vsel %vm416, %v1203, %v1211
      %v1228 = vsel %vm416, %v1213, %v1197
      %v1229 = vsel %vm416, %v1215, %v1199
      %v1230 = vsel %vm416, %v1217, %v1201
      %v1231 = vsel %vm416, %v1219, %v1203
      %s1232 = scalar_lea.vmem %s1, 64
      %v1233 = vld [vmem:[%s1232] sm:$0xf]
      %v1234 = vld [vmem:[%s1232 + $0x4] sm:$0xf]
      %v1235 = vld [vmem:[%s1232 + $0x8] sm:$0xf]
      %v1236 = vld [vmem:[%s1232 + $0xc] sm:$0xf]
      %v1237 = vpack.c.bf16 %v1193, %v1192
      %v1238 = vpack.c.bf16 %v1189, %v1188
      %v1239 = vpack.c.bf16 %v1185, %v1184
      %v1240 = vpack.c.bf16 %v1195, %v1194
      %v1241 = vpack.c.bf16 %v1191, %v1190
      %v1242 = vpack.c.bf16 %v1187, %v1186
      %v1243 = vpack.c.bf16 %v1020, %v1017
      %v1244 = vpack.c.bf16 %v1021, %v1018
      %v1245 = vpack.c.bf16 %v1022, %v1019
      %v1246 = vpack.c.bf16 %v1026, %v1023
      %v1247 = vpack.c.bf16 %v1027, %v1024
      %v1248 = vpack.c.bf16 %v1028, %v1025
      %v1249 = vpack.c.bf16 %v1225, %v1224
      %v1250 = vpack.c.bf16 %v1221, %v1220
      %v1251 = vpack.c.bf16 %v1229, %v1228
      %v1252 = vpack.c.bf16 %v1227, %v1226
      %v1253 = vpack.c.bf16 %v1223, %v1222
      %v1254 = vpack.c.bf16 %v1231, %v1230
      %v1259 = vunpack.c.l.b16 %v1233
      %v1260 = vunpack.c.l.b16 %v1234
      %v1261 = vunpack.c.l.b16 %v1235
      %v1262 = vunpack.c.l.b16 %v1236
      %v1263 = vpack.c.b16 %v1260, %v1259
      %v1264 = vpack.c.b16 %v1262, %v1261
      %v1266 = vsel %vm462, %v1263, 0
      %v1269 = vsel %vm462, %v1264, 0
      %1271 = vmatprep.subr.bf16.mxu0 %v1238
      %1272 = vmatpush1.bf16.msra.mxu0 %v1237
      %1273 = vmatprep.subr.bf16.mxu0 %v1241
      %1274 = vmatpush1.bf16.msra.mxu0 %v1240
      %1275 = vmatprep.subr.bf16.mxu0 %v1244
      %1276 = vmatpush1.bf16.msra.mxu0 %v1243
      %1277 = vmatprep.subr.bf16.mxu0 %v1247
      %1278 = vmatpush1.bf16.msra.mxu0 %v1246
      %1279 = vmatprep.subr.bf16.mxu0 %v1250
      %1280 = vmatpush1.bf16.msra.mxu0 %v1249
      %1281 = vmatprep.subr.bf16.mxu0 %v1253
      %1282 = vmatpush1.bf16.msra.mxu0 %v1252
      %1283 = vmatprep.subr.bf16.mxu0 0
      %1284 = vmatpush1.bf16.msra.mxu0 0
      %1285 = vmatprep.subr.bf16.mxu0 0
      %1286 = vmatpush1.bf16.msra.mxu0 0
      %1287 = vmatprep.subr.bf16.mxu0 0
      %1288 = vmatpush1.bf16.msra.mxu0 0
      %1289 = vmatprep.subr.bf16.mxu0 0
      %1290 = vmatpush1.bf16.msra.mxu0 0
      %1291 = vmatprep.subr.bf16.mxu0 0
      %1292 = vmatpush1.bf16.msra.mxu0 0
      %1293 = vmatprep.subr.bf16.mxu0 0
      %1294 = vmatpush1.bf16.msra.mxu0 0
      %1295 = vmatprep.subr.bf16.mxu0 0
      %1296 = vmatpush1.bf16.msra.mxu0 0
      %1297 = vmatprep.subr.bf16.mxu0 0
      %1298 = vmatpush1.bf16.msra.mxu0 0
      %1299 = vmatprep.subr.bf16.mxu0 0
      %1300 = vmatpush1.bf16.msra.mxu0 0
      %1301 = vmatprep.subr.bf16.mxu0 0
      %1302 = vmatpush1.bf16.msra.mxu0 0
      %1303 = vmatprep.mubr.bf16.mxu0 0
      %1304 = vmatmul.mubr.bf16.gmra.mrb[0].mxu0 %v1266
      %v1305 = vpop.f32.mrb[0].mxu0
      %v1306 = vadd.f32 0.0, %v1305
      %v1307 = vpop.f32.mrb[0].mxu0
      %v1308 = vadd.f32 0.0, %v1307
      %v1309 = vpop.f32.mrb[0].mxu0
      %v1310 = vadd.f32 0.0, %v1309
      %v1311 = vpop.f32.mrb[0].mxu0
      %v1312 = vadd.f32 0.0, %v1311
      %1313 = vmatprep.mubr.bf16.mxu0 0
      %1314 = vmatmul.mubr.bf16.gmra.mrb[0].mxu0 %v1269
      %v1315 = vpop.f32.mrb[0].mxu0
      %v1316 = vadd.f32 0.0, %v1315
      %v1317 = vpop.f32.mrb[0].mxu0
      %v1318 = vadd.f32 0.0, %v1317
      %v1319 = vpop.f32.mrb[0].mxu0
      %v1320 = vadd.f32 0.0, %v1319
      %v1321 = vpop.f32.mrb[0].mxu0
      %v1322 = vadd.f32 0.0, %v1321
      %1323 = vdwg.mxu0
      %1324 = vmatprep.subr.bf16.mxu0 0
      %1325 = vmatpush1.bf16.msra.mxu0 %v1239
      %1326 = vmatprep.subr.bf16.mxu0 0
      %1327 = vmatpush1.bf16.msra.mxu0 %v1242
      %1328 = vmatprep.subr.bf16.mxu0 0
      %1329 = vmatpush1.bf16.msra.mxu0 %v1245
      %1330 = vmatprep.subr.bf16.mxu0 0
      %1331 = vmatpush1.bf16.msra.mxu0 %v1248
      %1332 = vmatprep.subr.bf16.mxu0 0
      %1333 = vmatpush1.bf16.msra.mxu0 %v1251
      %1334 = vmatprep.subr.bf16.mxu0 0
      %1335 = vmatpush1.bf16.msra.mxu0 %v1254
      %1336 = vmatprep.subr.bf16.mxu0 0
      %1337 = vmatpush1.bf16.msra.mxu0 0
      %1338 = vmatprep.subr.bf16.mxu0 0
      %1339 = vmatpush1.bf16.msra.mxu0 0
      %1340 = vmatprep.subr.bf16.mxu0 0
      %1341 = vmatpush1.bf16.msra.mxu0 0
      %1342 = vmatprep.subr.bf16.mxu0 0
      %1343 = vmatpush1.bf16.msra.mxu0 0
      %1344 = vmatprep.subr.bf16.mxu0 0
      %1345 = vmatpush1.bf16.msra.mxu0 0
      %1346 = vmatprep.subr.bf16.mxu0 0
      %1347 = vmatpush1.bf16.msra.mxu0 0
      %1348 = vmatprep.subr.bf16.mxu0 0
      %1349 = vmatpush1.bf16.msra.mxu0 0
      %1350 = vmatprep.subr.bf16.mxu0 0
      %1351 = vmatpush1.bf16.msra.mxu0 0
      %1352 = vmatprep.subr.bf16.mxu0 0
      %1353 = vmatpush1.bf16.msra.mxu0 0
      %1354 = vmatprep.subr.bf16.mxu0 0
      %1355 = vmatpush1.bf16.msra.mxu0 0
      %1356 = vmatprep.mubr.bf16.mxu0 0
      %1357 = vmatmul.mubr.bf16.gmra.mrb[0].mxu0 %v1266
      %v1358 = vpop.f32.mrb[0].mxu0
      %v1359 = vadd.f32 0.0, %v1358
      %v1360 = vpop.f32.mrb[0].mxu0
      %v1361 = vpop.f32.mrb[0].mxu0
      %v1362 = vadd.f32 0.0, %v1361
      %v1363 = vpop.f32.mrb[0].mxu0
      %1364 = vmatprep.mubr.bf16.mxu0 0
      %1365 = vmatmul.mubr.bf16.gmra.mrb[0].mxu0 %v1269
      %v1366 = vpop.f32.mrb[0].mxu0
      %v1367 = vadd.f32 0.0, %v1366
      %v1368 = vpop.f32.mrb[0].mxu0
      %v1369 = vpop.f32.mrb[0].mxu0
      %v1370 = vadd.f32 0.0, %v1369
      %v1371 = vpop.f32.mrb[0].mxu0
      %1372 = vdwg.mxu0
      %v1377 = vunpack.c.l.b16 %v1138
      %v1378 = vunpack.c.l.b16 %v1139
      %v1379 = vunpack.c.l.b16 %v1140
      %v1380 = vunpack.c.l.b16 %v1141
      %v1381 = vpack.c.b16 %v1378, %v1377
      %v1382 = vpack.c.b16 %v1380, %v1379
      %v1384 = vsel %vm462, %v1381, 0
      %v1387 = vsel %vm462, %v1382, 0
      %1389 = vmatprep.subr.bf16.mxu0 %v1143
      %1390 = vmatpush1.bf16.msra.mxu0 %v1142
      %1391 = vmatprep.subr.bf16.mxu0 %v1146
      %1392 = vmatpush1.bf16.msra.mxu0 %v1145
      %1393 = vmatprep.subr.bf16.mxu0 %v1149
      %1394 = vmatpush1.bf16.msra.mxu0 %v1148
      %1395 = vmatprep.subr.bf16.mxu0 %v1152
      %1396 = vmatpush1.bf16.msra.mxu0 %v1151
      %1397 = vmatprep.subr.bf16.mxu0 %v1155
      %1398 = vmatpush1.bf16.msra.mxu0 %v1154
      %1399 = vmatprep.subr.bf16.mxu0 %v1158
      %1400 = vmatpush1.bf16.msra.mxu0 %v1157
      %1401 = vmatprep.subr.bf16.mxu0 0
      %1402 = vmatpush1.bf16.msra.mxu0 0
      %1403 = vmatprep.subr.bf16.mxu0 0
      %1404 = vmatpush1.bf16.msra.mxu0 0
      %1405 = vmatprep.subr.bf16.mxu0 0
      %1406 = vmatpush1.bf16.msra.mxu0 0
      %1407 = vmatprep.subr.bf16.mxu0 0
      %1408 = vmatpush1.bf16.msra.mxu0 0
      %1409 = vmatprep.subr.bf16.mxu0 0
      %1410 = vmatpush1.bf16.msra.mxu0 0
      %1411 = vmatprep.subr.bf16.mxu0 0
      %1412 = vmatpush1.bf16.msra.mxu0 0
      %1413 = vmatprep.subr.bf16.mxu0 0
      %1414 = vmatpush1.bf16.msra.mxu0 0
      %1415 = vmatprep.subr.bf16.mxu0 0
      %1416 = vmatpush1.bf16.msra.mxu0 0
      %1417 = vmatprep.subr.bf16.mxu0 0
      %1418 = vmatpush1.bf16.msra.mxu0 0
      %1419 = vmatprep.subr.bf16.mxu0 0
      %1420 = vmatpush1.bf16.msra.mxu0 0
      %1421 = vmatprep.mubr.bf16.mxu0 0
      %1422 = vmatmul.mubr.bf16.gmra.mrb[0].mxu0 %v1384
      %v1423 = vpop.f32.mrb[0].mxu0
      %v1424 = vadd.f32 %v1306, %v1423
      %v1425 = vpop.f32.mrb[0].mxu0
      %v1426 = vadd.f32 %v1308, %v1425
      %v1427 = vpop.f32.mrb[0].mxu0
      %v1428 = vadd.f32 %v1310, %v1427
      %v1429 = vpop.f32.mrb[0].mxu0
      %v1430 = vadd.f32 %v1312, %v1429
      %1431 = vmatprep.mubr.bf16.mxu0 0
      %1432 = vmatmul.mubr.bf16.gmra.mrb[0].mxu0 %v1387
      %v1433 = vpop.f32.mrb[0].mxu0
      %v1434 = vadd.f32 %v1316, %v1433
      %v1435 = vpop.f32.mrb[0].mxu0
      %v1436 = vadd.f32 %v1318, %v1435
      %v1437 = vpop.f32.mrb[0].mxu0
      %v1438 = vadd.f32 %v1320, %v1437
      %v1439 = vpop.f32.mrb[0].mxu0
      %v1440 = vadd.f32 %v1322, %v1439
      %1441 = vdwg.mxu0
      %1442 = vmatprep.subr.bf16.mxu0 0
      %1443 = vmatpush1.bf16.msra.mxu0 %v1144
      %1444 = vmatprep.subr.bf16.mxu0 0
      %1445 = vmatpush1.bf16.msra.mxu0 %v1147
      %1446 = vmatprep.subr.bf16.mxu0 0
      %1447 = vmatpush1.bf16.msra.mxu0 %v1150
      %1448 = vmatprep.subr.bf16.mxu0 0
      %1449 = vmatpush1.bf16.msra.mxu0 %v1153
      %1450 = vmatprep.subr.bf16.mxu0 0
      %1451 = vmatpush1.bf16.msra.mxu0 %v1156
      %1452 = vmatprep.subr.bf16.mxu0 0
      %1453 = vmatpush1.bf16.msra.mxu0 %v1159
      %1454 = vmatprep.subr.bf16.mxu0 0
      %1455 = vmatpush1.bf16.msra.mxu0 0
      %1456 = vmatprep.subr.bf16.mxu0 0
      %1457 = vmatpush1.bf16.msra.mxu0 0
      %1458 = vmatprep.subr.bf16.mxu0 0
      %1459 = vmatpush1.bf16.msra.mxu0 0
      %1460 = vmatprep.subr.bf16.mxu0 0
      %1461 = vmatpush1.bf16.msra.mxu0 0
      %1462 = vmatprep.subr.bf16.mxu0 0
      %1463 = vmatpush1.bf16.msra.mxu0 0
      %1464 = vmatprep.subr.bf16.mxu0 0
      %1465 = vmatpush1.bf16.msra.mxu0 0
      %1466 = vmatprep.subr.bf16.mxu0 0
      %1467 = vmatpush1.bf16.msra.mxu0 0
      %1468 = vmatprep.subr.bf16.mxu0 0
      %1469 = vmatpush1.bf16.msra.mxu0 0
      %1470 = vmatprep.subr.bf16.mxu0 0
      %1471 = vmatpush1.bf16.msra.mxu0 0
      %1472 = vmatprep.subr.bf16.mxu0 0
      %1473 = vmatpush1.bf16.msra.mxu0 0
      %1474 = vmatprep.mubr.bf16.mxu0 0
      %1475 = vmatmul.mubr.bf16.gmra.mrb[0].mxu0 %v1384
      %v1476 = vpop.f32.mrb[0].mxu0
      %v1477 = vadd.f32 %v1359, %v1476
      %v1478 = vpop.f32.mrb[0].mxu0
      %v1479 = vpop.f32.mrb[0].mxu0
      %v1480 = vadd.f32 %v1362, %v1479
      %v1481 = vpop.f32.mrb[0].mxu0
      %1482 = vmatprep.mubr.bf16.mxu0 0
      %1483 = vmatmul.mubr.bf16.gmra.mrb[0].mxu0 %v1387
      %v1484 = vpop.f32.mrb[0].mxu0
      %v1485 = vadd.f32 %v1367, %v1484
      %v1486 = vpop.f32.mrb[0].mxu0
      %v1487 = vpop.f32.mrb[0].mxu0
      %v1488 = vadd.f32 %v1370, %v1487
      %v1489 = vpop.f32.mrb[0].mxu0
      %1490 = vdwg.mxu0
      %1491 = vrot.lane.b32.xlu0 %v1017, 111
      %v1492 = vpop.permute.xlu0 %1491
      %1493 = vrot.lane.b32.xlu0 %v1020, 111
      %v1494 = vpop.permute.xlu0 %1493
      %1495 = vrot.lane.b32.xlu0 %v1023, 111
      %v1496 = vpop.permute.xlu0 %1495
      %1497 = vrot.lane.b32.xlu0 %v1026, 111
      %v1498 = vpop.permute.xlu0 %1497
      %1499 = vrot.lane.b32.xlu0 %v1018, 111
      %v1500 = vpop.permute.xlu0 %1499
      %1501 = vrot.lane.b32.xlu0 %v1021, 111
      %v1502 = vpop.permute.xlu0 %1501
      %1503 = vrot.lane.b32.xlu0 %v1024, 111
      %v1504 = vpop.permute.xlu0 %1503
      %1505 = vrot.lane.b32.xlu0 %v1027, 111
      %v1506 = vpop.permute.xlu0 %1505
      %1507 = vrot.lane.b32.xlu0 %v1019, 111
      %v1508 = vpop.permute.xlu0 %1507
      %1509 = vrot.lane.b32.xlu0 %v1022, 111
      %v1510 = vpop.permute.xlu0 %1509
      %1511 = vrot.lane.b32.xlu0 %v1025, 111
      %v1512 = vpop.permute.xlu0 %1511
      %1513 = vrot.lane.b32.xlu0 %v1028, 111
      %v1514 = vpop.permute.xlu0 %1513
      %v1515 = vsel %vm713, %v1500, %v1508
      %v1516 = vsel %vm713, %v1502, %v1510
      %v1517 = vsel %vm713, %v1504, %v1512
      %v1518 = vsel %vm713, %v1506, %v1514
      %v1519 = vsel %vm713, %v1492, %v1500
      %v1520 = vsel %vm713, %v1494, %v1502
      %v1521 = vsel %vm713, %v1496, %v1504
      %v1522 = vsel %vm713, %v1498, %v1506
      %v1523 = vsel %vm713, %v1508, %v1492
      %v1524 = vsel %vm713, %v1510, %v1494
      %v1525 = vsel %vm713, %v1512, %v1496
      %v1526 = vsel %vm713, %v1514, %v1498
      %1527 = vrot.lane.b32.xlu0 %v1017, 110
      %v1528 = vpop.permute.xlu0 %1527
      %1529 = vrot.lane.b32.xlu0 %v1020, 110
      %v1530 = vpop.permute.xlu0 %1529
      %1531 = vrot.lane.b32.xlu0 %v1023, 110
      %v1532 = vpop.permute.xlu0 %1531
      %1533 = vrot.lane.b32.xlu0 %v1026, 110
      %v1534 = vpop.permute.xlu0 %1533
      %1535 = vrot.lane.b32.xlu0 %v1018, 110
      %v1536 = vpop.permute.xlu0 %1535
      %1537 = vrot.lane.b32.xlu0 %v1021, 110
      %v1538 = vpop.permute.xlu0 %1537
      %1539 = vrot.lane.b32.xlu0 %v1024, 110
      %v1540 = vpop.permute.xlu0 %1539
      %1541 = vrot.lane.b32.xlu0 %v1027, 110
      %v1542 = vpop.permute.xlu0 %1541
      %1543 = vrot.lane.b32.xlu0 %v1019, 110
      %v1544 = vpop.permute.xlu0 %1543
      %1545 = vrot.lane.b32.xlu0 %v1022, 110
      %v1546 = vpop.permute.xlu0 %1545
      %1547 = vrot.lane.b32.xlu0 %v1025, 110
      %v1548 = vpop.permute.xlu0 %1547
      %1549 = vrot.lane.b32.xlu0 %v1028, 110
      %v1550 = vpop.permute.xlu0 %1549
      %v1551 = vsel %vm750, %v1536, %v1544
      %v1552 = vsel %vm750, %v1538, %v1546
      %v1553 = vsel %vm750, %v1540, %v1548
      %v1554 = vsel %vm750, %v1542, %v1550
      %v1555 = vsel %vm750, %v1528, %v1536
      %v1556 = vsel %vm750, %v1530, %v1538
      %v1557 = vsel %vm750, %v1532, %v1540
      %v1558 = vsel %vm750, %v1534, %v1542
      %v1559 = vsel %vm750, %v1544, %v1528
      %v1560 = vsel %vm750, %v1546, %v1530
      %v1561 = vsel %vm750, %v1548, %v1532
      %v1562 = vsel %vm750, %v1550, %v1534
      %1563 = vrot.lane.b32.xlu0 %v1017, 109
      %v1564 = vpop.permute.xlu0 %1563
      %1565 = vrot.lane.b32.xlu0 %v1020, 109
      %v1566 = vpop.permute.xlu0 %1565
      %1567 = vrot.lane.b32.xlu0 %v1023, 109
      %v1568 = vpop.permute.xlu0 %1567
      %1569 = vrot.lane.b32.xlu0 %v1026, 109
      %v1570 = vpop.permute.xlu0 %1569
      %1571 = vrot.lane.b32.xlu0 %v1018, 109
      %v1572 = vpop.permute.xlu0 %1571
      %1573 = vrot.lane.b32.xlu0 %v1021, 109
      %v1574 = vpop.permute.xlu0 %1573
      %1575 = vrot.lane.b32.xlu0 %v1024, 109
      %v1576 = vpop.permute.xlu0 %1575
      %1577 = vrot.lane.b32.xlu0 %v1027, 109
      %v1578 = vpop.permute.xlu0 %1577
      %1579 = vrot.lane.b32.xlu0 %v1019, 109
      %v1580 = vpop.permute.xlu0 %1579
      %1581 = vrot.lane.b32.xlu0 %v1022, 109
      %v1582 = vpop.permute.xlu0 %1581
      %1583 = vrot.lane.b32.xlu0 %v1025, 109
      %v1584 = vpop.permute.xlu0 %1583
      %1585 = vrot.lane.b32.xlu0 %v1028, 109
      %v1586 = vpop.permute.xlu0 %1585
      %v1587 = vsel %vm787, %v1572, %v1580
      %v1588 = vsel %vm787, %v1574, %v1582
      %v1589 = vsel %vm787, %v1576, %v1584
      %v1590 = vsel %vm787, %v1578, %v1586
      %v1591 = vsel %vm787, %v1564, %v1572
      %v1592 = vsel %vm787, %v1566, %v1574
      %v1593 = vsel %vm787, %v1568, %v1576
      %v1594 = vsel %vm787, %v1570, %v1578
      %v1595 = vsel %vm787, %v1580, %v1564
      %v1596 = vsel %vm787, %v1582, %v1566
      %v1597 = vsel %vm787, %v1584, %v1568
      %v1598 = vsel %vm787, %v1586, %v1570
      %s1599 = scalar_lea.vmem %s1, 80
      %v1600 = vld [vmem:[%s1599] sm:$0xf]
      %v1601 = vld [vmem:[%s1599 + $0x4] sm:$0xf]
      %v1602 = vld [vmem:[%s1599 + $0x8] sm:$0xf]
      %v1603 = vld [vmem:[%s1599 + $0xc] sm:$0xf]
      %v1604 = vpack.c.bf16 %v1520, %v1519
      %v1605 = vpack.c.bf16 %v1516, %v1515
      %v1606 = vpack.c.bf16 %v1524, %v1523
      %v1607 = vpack.c.bf16 %v1522, %v1521
      %v1608 = vpack.c.bf16 %v1518, %v1517
      %v1609 = vpack.c.bf16 %v1526, %v1525
      %v1610 = vpack.c.bf16 %v1556, %v1555
      %v1611 = vpack.c.bf16 %v1552, %v1551
      %v1612 = vpack.c.bf16 %v1560, %v1559
      %v1613 = vpack.c.bf16 %v1558, %v1557
      %v1614 = vpack.c.bf16 %v1554, %v1553
      %v1615 = vpack.c.bf16 %v1562, %v1561
      %v1616 = vpack.c.bf16 %v1592, %v1591
      %v1617 = vpack.c.bf16 %v1588, %v1587
      %v1618 = vpack.c.bf16 %v1596, %v1595
      %v1619 = vpack.c.bf16 %v1594, %v1593
      %v1620 = vpack.c.bf16 %v1590, %v1589
      %v1621 = vpack.c.bf16 %v1598, %v1597
      %v1626 = vunpack.c.l.b16 %v1600
      %v1627 = vunpack.c.l.b16 %v1601
      %v1628 = vunpack.c.l.b16 %v1602
      %v1629 = vunpack.c.l.b16 %v1603
      %v1630 = vpack.c.b16 %v1627, %v1626
      %v1631 = vpack.c.b16 %v1629, %v1628
      %v1633 = vsel %vm462, %v1630, 0
      %v1636 = vsel %vm462, %v1631, 0
      %1638 = vmatprep.subr.bf16.mxu0 %v1605
      %1639 = vmatpush1.bf16.msra.mxu0 %v1604
      %1640 = vmatprep.subr.bf16.mxu0 %v1608
      %1641 = vmatpush1.bf16.msra.mxu0 %v1607
      %1642 = vmatprep.subr.bf16.mxu0 %v1611
      %1643 = vmatpush1.bf16.msra.mxu0 %v1610
      %1644 = vmatprep.subr.bf16.mxu0 %v1614
      %1645 = vmatpush1.bf16.msra.mxu0 %v1613
      %1646 = vmatprep.subr.bf16.mxu0 %v1617
      %1647 = vmatpush1.bf16.msra.mxu0 %v1616
      %1648 = vmatprep.subr.bf16.mxu0 %v1620
      %1649 = vmatpush1.bf16.msra.mxu0 %v1619
      %1650 = vmatprep.subr.bf16.mxu0 0
      %1651 = vmatpush1.bf16.msra.mxu0 0
      %1652 = vmatprep.subr.bf16.mxu0 0
      %1653 = vmatpush1.bf16.msra.mxu0 0
      %1654 = vmatprep.subr.bf16.mxu0 0
      %1655 = vmatpush1.bf16.msra.mxu0 0
      %1656 = vmatprep.subr.bf16.mxu0 0
      %1657 = vmatpush1.bf16.msra.mxu0 0
      %1658 = vmatprep.subr.bf16.mxu0 0
      %1659 = vmatpush1.bf16.msra.mxu0 0
      %1660 = vmatprep.subr.bf16.mxu0 0
      %1661 = vmatpush1.bf16.msra.mxu0 0
      %1662 = vmatprep.subr.bf16.mxu0 0
      %1663 = vmatpush1.bf16.msra.mxu0 0
      %1664 = vmatprep.subr.bf16.mxu0 0
      %1665 = vmatpush1.bf16.msra.mxu0 0
      %1666 = vmatprep.subr.bf16.mxu0 0
      %1667 = vmatpush1.bf16.msra.mxu0 0
      %1668 = vmatprep.subr.bf16.mxu0 0
      %1669 = vmatpush1.bf16.msra.mxu0 0
      %1670 = vmatprep.mubr.bf16.mxu0 0
      %1671 = vmatmul.mubr.bf16.gmra.mrb[0].mxu0 %v1633
      %v1672 = vpop.f32.mrb[0].mxu0
      %v1673 = vadd.f32 0.0, %v1672
      %v1674 = vpop.f32.mrb[0].mxu0
      %v1675 = vadd.f32 0.0, %v1674
      %v1676 = vpop.f32.mrb[0].mxu0
      %v1677 = vadd.f32 0.0, %v1676
      %v1678 = vpop.f32.mrb[0].mxu0
      %v1679 = vadd.f32 0.0, %v1678
      %1680 = vmatprep.mubr.bf16.mxu0 0
      %1681 = vmatmul.mubr.bf16.gmra.mrb[0].mxu0 %v1636
      %v1682 = vpop.f32.mrb[0].mxu0
      %v1683 = vadd.f32 0.0, %v1682
      %v1684 = vpop.f32.mrb[0].mxu0
      %v1685 = vadd.f32 0.0, %v1684
      %v1686 = vpop.f32.mrb[0].mxu0
      %v1687 = vadd.f32 0.0, %v1686
      %v1688 = vpop.f32.mrb[0].mxu0
      %v1689 = vadd.f32 0.0, %v1688
      %1690 = vdwg.mxu0
      %1691 = vmatprep.subr.bf16.mxu0 0
      %1692 = vmatpush1.bf16.msra.mxu0 %v1606
      %1693 = vmatprep.subr.bf16.mxu0 0
      %1694 = vmatpush1.bf16.msra.mxu0 %v1609
      %1695 = vmatprep.subr.bf16.mxu0 0
      %1696 = vmatpush1.bf16.msra.mxu0 %v1612
      %1697 = vmatprep.subr.bf16.mxu0 0
      %1698 = vmatpush1.bf16.msra.mxu0 %v1615
      %1699 = vmatprep.subr.bf16.mxu0 0
      %1700 = vmatpush1.bf16.msra.mxu0 %v1618
      %1701 = vmatprep.subr.bf16.mxu0 0
      %1702 = vmatpush1.bf16.msra.mxu0 %v1621
      %1703 = vmatprep.subr.bf16.mxu0 0
      %1704 = vmatpush1.bf16.msra.mxu0 0
      %1705 = vmatprep.subr.bf16.mxu0 0
      %1706 = vmatpush1.bf16.msra.mxu0 0
      %1707 = vmatprep.subr.bf16.mxu0 0
      %1708 = vmatpush1.bf16.msra.mxu0 0
      %1709 = vmatprep.subr.bf16.mxu0 0
      %1710 = vmatpush1.bf16.msra.mxu0 0
      %1711 = vmatprep.subr.bf16.mxu0 0
      %1712 = vmatpush1.bf16.msra.mxu0 0
      %1713 = vmatprep.subr.bf16.mxu0 0
      %1714 = vmatpush1.bf16.msra.mxu0 0
      %1715 = vmatprep.subr.bf16.mxu0 0
      %1716 = vmatpush1.bf16.msra.mxu0 0
      %1717 = vmatprep.subr.bf16.mxu0 0
      %1718 = vmatpush1.bf16.msra.mxu0 0
      %1719 = vmatprep.subr.bf16.mxu0 0
      %1720 = vmatpush1.bf16.msra.mxu0 0
      %1721 = vmatprep.subr.bf16.mxu0 0
      %1722 = vmatpush1.bf16.msra.mxu0 0
      %1723 = vmatprep.mubr.bf16.mxu0 0
      %1724 = vmatmul.mubr.bf16.gmra.mrb[0].mxu0 %v1633
      %v1725 = vpop.f32.mrb[0].mxu0
      %v1726 = vadd.f32 0.0, %v1725
      %v1727 = vpop.f32.mrb[0].mxu0
      %v1728 = vpop.f32.mrb[0].mxu0
      %v1729 = vadd.f32 0.0, %v1728
      %v1730 = vpop.f32.mrb[0].mxu0
      %1731 = vmatprep.mubr.bf16.mxu0 0
      %1732 = vmatmul.mubr.bf16.gmra.mrb[0].mxu0 %v1636
      %v1733 = vpop.f32.mrb[0].mxu0
      %v1734 = vadd.f32 0.0, %v1733
      %v1735 = vpop.f32.mrb[0].mxu0
      %v1736 = vpop.f32.mrb[0].mxu0
      %v1737 = vadd.f32 0.0, %v1736
      %v1738 = vpop.f32.mrb[0].mxu0
      %1739 = vdwg.mxu0
      %v1740 = vadd.f32 %v1424, %v1673
      %v1741 = vadd.f32 %v1426, %v1675
      %v1742 = vadd.f32 %v1477, %v1726
      %v1743 = vadd.f32 %v1428, %v1677
      %v1744 = vadd.f32 %v1430, %v1679
      %v1745 = vadd.f32 %v1480, %v1729
      %v1746 = vadd.f32 %v1434, %v1683
      %v1747 = vadd.f32 %v1436, %v1685
      %v1748 = vadd.f32 %v1485, %v1734
      %v1749 = vadd.f32 %v1438, %v1687
      %v1750 = vadd.f32 %v1440, %v1689
      %v1751 = vadd.f32 %v1488, %v1737
      %s1752 = scalar_lea.vmem %s2, 32
      %v1753 = vld [vmem:[%s1752] sm:$0xff]
      %v1754 = vld [vmem:[%s1752 + $0x8] sm:$0xff]
      %v1755 = vld [vmem:[%s1752 + $0x10] sm:$0xff]
      %v1756 = vld [vmem:[%s1752 + $0x18] sm:$0xff]
      %1758 = vset.pattern.permute.xlu0 0
      %1759 = vperm.xlu0 %1758, %v1753
      %v1760 = vpop.permute.xlu0 %1759
      %1763 = vset.pattern.permute.xlu0 0
      %1764 = vperm.xlu0 %1763, %v1754
      %v1765 = vpop.permute.xlu0 %1764
      %1768 = vset.pattern.permute.xlu0 0
      %1769 = vperm.xlu0 %1768, %v1755
      %v1770 = vpop.permute.xlu0 %1769
      %1773 = vset.pattern.permute.xlu0 0
      %1774 = vperm.xlu0 %1773, %v1756
      %v1775 = vpop.permute.xlu0 %1774
      %v1777 = vadd.f32 %v1740, %v1760
      %v1778 = vadd.f32 %v1741, %v1760
      %v1779 = vadd.f32 %v1742, %v1760
      %v1780 = vadd.f32 %v1743, %v1765
      %v1781 = vadd.f32 %v1744, %v1765
      %v1782 = vadd.f32 %v1745, %v1765
      %v1783 = vadd.f32 %v1746, %v1770
      %v1784 = vadd.f32 %v1747, %v1770
      %v1785 = vadd.f32 %v1748, %v1770
      %v1786 = vadd.f32 %v1749, %v1775
      %v1787 = vadd.f32 %v1750, %v1775
      %v1788 = vadd.f32 %v1751, %v1775
      %v1789 = vmax.f32 %v1777, 0.0
      %v1790 = vmax.f32 %v1778, 0.0
      %v1791 = vmax.f32 %v1779, 0.0
      %v1792 = vmax.f32 %v1780, 0.0
      %v1793 = vmax.f32 %v1781, 0.0
      %v1794 = vmax.f32 %v1782, 0.0
      %v1795 = vmax.f32 %v1783, 0.0
      %v1796 = vmax.f32 %v1784, 0.0
      %v1797 = vmax.f32 %v1785, 0.0
      %v1798 = vmax.f32 %v1786, 0.0
      %v1799 = vmax.f32 %v1787, 0.0
      %v1800 = vmax.f32 %v1788, 0.0
      %v1801 = vmul.f32 %v1789, %v1005
      %v1802 = vmul.f32 %v1790, %v1009
      %v1803 = vmul.f32 %v1791, %v1013
      %v1804 = vmul.f32 %v1792, %v1005
      %v1805 = vmul.f32 %v1793, %v1009
      %v1806 = vmul.f32 %v1794, %v1013
      %v1807 = vmul.f32 %v1795, %v1005
      %v1808 = vmul.f32 %v1796, %v1009
      %v1809 = vmul.f32 %v1797, %v1013
      %v1810 = vmul.f32 %v1798, %v1005
      %v1811 = vmul.f32 %v1799, %v1009
      %v1812 = vmul.f32 %v1800, %v1013
      %v1813 = vpack.c.bf16 %v1804, %v1801
      %v1814 = vpack.c.bf16 %v1805, %v1802
      %v1815 = vpack.c.bf16 %v1806, %v1803
      %v1816 = vpack.c.bf16 %v1810, %v1807
      %v1817 = vpack.c.bf16 %v1811, %v1808
      %v1818 = vpack.c.bf16 %v1812, %v1809
      %v1825 = vunpack.c.l.b16 %v1813
      %v1826 = vunpack.c.l.b16 %v1814
      %v1827 = vunpack.c.l.b16 %v1815
      %v1828 = vunpack.c.h.b16 %v1813
      %v1829 = vunpack.c.h.b16 %v1814
      %v1830 = vunpack.c.h.b16 %v1815
      %v1831 = vunpack.c.l.b16 %v1816
      %v1832 = vunpack.c.l.b16 %v1817
      %v1833 = vunpack.c.l.b16 %v1818
      %v1834 = vunpack.c.h.b16 %v1816
      %v1835 = vunpack.c.h.b16 %v1817
      %v1836 = vunpack.c.h.b16 %v1818
      %v1837 = vpack.c.b16 %v1826, %v1825
      %v1838 = vpack.c.b16 %v1827, %v1827
      %v1839 = vpack.c.b16 %v1829, %v1828
      %v1840 = vpack.c.b16 %v1830, %v1830
      %v1841 = vpack.c.b16 %v1832, %v1831
      %v1842 = vpack.c.b16 %v1833, %v1833
      %v1843 = vpack.c.b16 %v1835, %v1834
      %v1844 = vpack.c.b16 %v1836, %v1836
      %1853 = vst [vmem:[%s197] sm:$0xff] %v1837
      %1854 = vst [vmem:[%s197 + $0x8] sm:$0xf] %v1838
      %1855 = vst [vmem:[%s197 + $0xc] sm:$0xff] %v1839
      %1856 = vst [vmem:[%s197 + $0x14] sm:$0xf] %v1840
      %1857 = vst [vmem:[%s197 + $0x18] sm:$0xff] %v1841
      %1858 = vst [vmem:[%s197 + $0x20] sm:$0xf] %v1842
      %1859 = vst [vmem:[%s197 + $0x24] sm:$0xff] %v1843
      %1860 = vst [vmem:[%s197 + $0x2c] sm:$0xf] %v1844
      %p1861 = scmp.lt.s32.totalorder %s15, 1
      %s1862 = scalar_select %p1861, %s15, 1
      %s1863 = smul.addr %s1862, 12
      %s1864 = smul.addr %s1863, 4
      %s1865 = scalar_lea.vmem %s4, %s1864
      // Predicated region
      $region37: #{multi_conv_forward.1} parent=35 // pred_check
        %p1866 = pneg %p122
      $region38: #{multi_conv_forward.1} parent=35 // pred_check_branch
        %1868 = sbr.rel (%p1866) target = $region40
      $region39: #{multi_conv_forward.1} parent=35 // pred_region
        _
      $region40: #{multi_conv_forward.1} parent=35 // pred_fallthru
        _
    $region36: #{multi_conv_forward.1} parent=5 // pred_fallthru
      _
    %p1869 = scmp.le.s32.totalorder 2, %s10
    // Predicated region
    $region41: #{multi_conv_forward.1} parent=5 // pred_check
      %p1870 = pneg %p1869
    $region42: #{multi_conv_forward.1} parent=5 // pred_check_branch
      %1872 = sbr.rel (%p1870) target = $region44
    $region43: #{multi_conv_forward.1} parent=5 // pred_region
      %s1873 = ssub.s32 %s10, 2
      // Predicated region
      $region45: #{multi_conv_forward.1} parent=43 // pred_check
        %p1874 = pneg %p128
      $region46: #{multi_conv_forward.1} parent=43 // pred_check_branch
        %1876 = sbr.rel (%p1874) target = $region48
      $region47: #{multi_conv_forward.1} parent=43 // pred_region
        %p1877 = scmp.lt.s32.totalorder %s16, 1
        %s1878 = scalar_select %p1877, %s16, 1
        %s1879 = smul.addr %s1878, 12
        %s1880 = smul.addr %s1879, 4
        %s1881 = scalar_lea.vmem %s4, %s1880
      $region48: #{multi_conv_forward.1} parent=43 // pred_fallthru
        _
    $region44: #{multi_conv_forward.1} parent=5 // pred_fallthru
      _
  $region6: #{multi_conv_forward.1} parent=0 // loop_footer
    %s14 = sadd.s32 1, %s10
  $region7: #{multi_conv_forward.1} parent=0 // loop_footer_branch
    %9 = sbr.rel target = $region3
  $region8: #{multi_conv_forward.1} parent=0 // loop_exit
    _

</llo_original>
